<compile_context>
chip_gen: v7x
topology: tpu7x:2x2x1
jax: 0.10.0
libtpu: 0.0.40
codegen_flags: <defaults>
</compile_context>

<pallas_src>
import functools
import math

import jax
import jax.numpy as jnp
from jax.experimental import pallas as pl
from jax.experimental.pallas import tpu as pltpu

TEMPERATURE = 0.1
EPS = 1.0e-12          # torch F.normalize eps


def _round_up(x, m):
    return (x + m - 1) // m * m


def _l2_normalize(x):
    """x / max(||x||, eps) in f32 via rsqrt (matches torch.nn.functional.normalize)."""
    x = x.astype(jnp.float32)
    ss = jnp.sum(x * x, axis=-1, keepdims=True)
    return x * jax.lax.rsqrt(jnp.maximum(ss, EPS * EPS))


def _matmul_nt(a, b):
    """a @ b.T via dot_general contracting the feature dim (no explicit transpose)."""
    return jax.lax.dot_general(
        a, b, dimension_numbers=(((1,), (1,)), ((), ())),
        preferred_element_type=jnp.float32)


def _fold_lanes(x):
    """(r, c) -> (r, 128): fold 128-lane groups with VPU adds (c % 128 == 0, aligned)."""
    acc = x[:, :128]
    for c in range(128, x.shape[1], 128):
        acc = acc + x[:, c:c + 128]
    return acc


def _fold_sublanes(x):
    """(r, c) -> (8, c): fold 8-sublane groups with VPU adds (r % 8 == 0, aligned)."""
    acc = x[:8, :]
    for r in range(8, x.shape[0], 8):
        acc = acc + x[r:r + 8, :]
    return acc


def _ntxent_kernel(q_ref, k_ref, si_ref, sjs_ref, sjc_ref, s_i, s_js, *, bn):
    qi = pl.program_id(0)
    ki = pl.program_id(1)
    nk = pl.num_programs(1)
    inv_t = jnp.float32(1.0 / TEMPERATURE)   # fixed softmax shift: logits <= 1/T

    @pl.when(ki == 0)
    def _init():
        s_i[...] = jnp.zeros_like(s_i)
        s_js[...] = jnp.zeros_like(s_js)

    q = q_ref[...]                           # (2*bn, d): [z_i block ; z_j block]
    k = k_ref[...]
    ziq = q[:bn, :]
    zjq = q[bn:, :]
    zjk = k[bn:, :]

    # Logits come out already divided by T (sqrt(1/T) folded into both operands).
    #   l_i  : (bn, 2*bn) = [ sim_zii tile | sim_zij tile ]   (rows are z_i)
    #   l_jj : (bn, bn)   =   sim_zjj tile                    (rows are z_j)
    l_i = _matmul_nt(ziq, k)
    l_jj = _matmul_nt(zjq, zjk)
    p_i = jnp.exp(l_i - inv_t)
    p_jj = jnp.exp(l_jj - inv_t)
    p_ii = p_i[:, :bn]
    p_ij = p_i[:, bn:]                       # cross tile, shared by both directions

    # loss_j cross term: per-tile column partial sums of exp(sim_zij), folded to 8
    # sublanes with plain VPU adds; the reduction over qi finishes in the O(N) epilogue.
    sjc_ref[...] = _fold_sublanes(p_ij)

    # loss_i cross term (never needs a diagonal mask).
    s_i[...] += _fold_lanes(p_ij)

    # Self-similarity terms: diagonal excluded exactly, but the mask only exists on
    # diagonal tiles — off-diagonal tiles pay zero masking cost.
    @pl.when(qi != ki)
    def _off_diag():
        s_i[...] += _fold_lanes(p_ii)
        s_js[...] += _fold_lanes(p_jj)

    @pl.when(qi == ki)
    def _on_diag():
        r = jax.lax.broadcasted_iota(jnp.int32, (bn, bn), 0)
        c = jax.lax.broadcasted_iota(jnp.int32, (bn, bn), 1)
        keep = r != c
        s_i[...] += _fold_lanes(jnp.where(keep, p_ii, 0.0))
        s_js[...] += _fold_lanes(jnp.where(keep, p_jj, 0.0))

    @pl.when(ki == nk - 1)
    def _finalize():
        # One cross-lane reduction per row block (amortized over nk grid steps).
        si_ref[...] = jnp.sum(s_i[...], axis=-1, keepdims=True)
        sjs_ref[...] = jnp.sum(s_js[...], axis=-1, keepdims=True)


def ntxent_loss(z_i: jax.Array, z_j: jax.Array, *, block_n: int = 512,
                mxu_dtype=jnp.bfloat16) -> jax.Array:
    """Pallas TPU implementation of NTXenLoss(temperature=0.1).forward(z_i, z_j).

    block_n:   similarity-tile row/col block, rounded to a multiple of 128.
               512 is a good default on v6e/v7x; use 128-256 on v5e.
    mxu_dtype: matmul operand dtype.  bf16 (default) is 3-8x faster on the MXU
               (critical on v5e and for f32 inputs) at ~1e-3 relative loss error;
               pass jnp.float32 for near-exact results.
    """
    assert z_i.shape == z_j.shape and z_i.ndim == 2
    n, d = z_i.shape
    inv_t = 1.0 / TEMPERATURE

    # --- O(N*d) prologue in plain JAX: normalize once, fold sqrt(1/T) into both sides
    # so every pairwise MXU product is already a temperature-scaled cosine. ---
    zi = _l2_normalize(z_i) * jnp.float32(math.sqrt(inv_t))
    zj = _l2_normalize(z_j) * jnp.float32(math.sqrt(inv_t))
    diag = jnp.sum(zi * zj, axis=-1)         # correct-pair logits diag(sim_zij)/T, f32

    # --- Tiling / padding (zero padding is exact: each padded row/col contributes
    # exactly exp(-1/T) to a softmax denominator, corrected analytically below). ---
    d_pad = _round_up(d, 128)
    bn = max(128, min(_round_up(block_n, 128), _round_up(n, 128)))
    n_pad = _round_up(n, bn)
    nq = n_pad // bn

    pad = ((0, n_pad - n), (0, d_pad - d))
    zi_p = jnp.pad(zi, pad).astype(mxu_dtype)
    zj_p = jnp.pad(zj, pad).astype(mxu_dtype)
    # Pre-stack z_i / z_j per block so each tile is one (2*bn, d) operand: two wide MXU
    # products per tile (keeps the stationary operand loaded longer) and only two DMA
    # streams instead of four.
    zs = jnp.concatenate(
        [zi_p.reshape(nq, bn, d_pad), zj_p.reshape(nq, bn, d_pad)], axis=1,
    ).reshape(nq * 2 * bn, d_pad)

    kernel = functools.partial(_ntxent_kernel, bn=bn)

    q_spec = pl.BlockSpec((2 * bn, d_pad), lambda qi, ki: (qi, 0))  # resident across ki
    k_spec = pl.BlockSpec((2 * bn, d_pad), lambda qi, ki: (ki, 0))
    out_shape = (
        jax.ShapeDtypeStruct((n_pad, 1), jnp.float32),        # loss_i row sums
        jax.ShapeDtypeStruct((n_pad, 1), jnp.float32),        # loss_j self row sums
        jax.ShapeDtypeStruct((nq, nq, 8, bn), jnp.float32),   # loss_j cross partials
    )
    out_specs = (
        pl.BlockSpec((bn, 1), lambda qi, ki: (qi, 0)),
        pl.BlockSpec((bn, 1), lambda qi, ki: (qi, 0)),
        pl.BlockSpec((None, None, 8, bn), lambda qi, ki: (qi, ki, 0, 0)),
    )

    # Size the VMEM request to actual need (don't pin all 64 MiB of a v7x TensorCore).
    itemsize = jnp.dtype(mxu_dtype).itemsize
    est = (2 * 2 * (2 * bn) * d_pad * itemsize   # q/k input streams, double-buffered
           + 10 * bn * bn * 4                    # (bn, 2bn)/(bn, bn) logit/exp temps
           + 2 * bn * 128 * 4                    # lane-resident accumulators
           + 4 * (8 * bn + bn) * 4)              # small outputs (double-buffered)
    vmem_limit = int(max(32 * 1024 * 1024, min(int(1.3 * est), 56 * 1024 * 1024)))

    s_i, s_jself, s_jcross = pl.pallas_call(
        kernel,
        out_shape=out_shape,
        grid_spec=pltpu.PrefetchScalarGridSpec(
            num_scalar_prefetch=0,
            grid=(nq, nq),                       # reduction (key) axis last
            in_specs=[q_spec, k_spec],
            out_specs=out_specs,
            scratch_shapes=[pltpu.VMEM((bn, 128), jnp.float32)] * 2,  # s_i, s_j_self
        ),
        compiler_params=pltpu.CompilerParams(
            dimension_semantics=("parallel", "arbitrary"),   # row blocks across TCs
            vmem_limit_bytes=vmem_limit,
        ),
    )(zs, zs)

    # --- O(N) epilogue: finish the j-direction column reduction, apply the analytic
    # padded-row correction (each padded zero row/col contributed exactly exp(-1/T) to
    # both halves of a denominator), and assemble loss = mean(lse_i-diag)+mean(lse_j-diag).
    pad_corr = 2.0 * (n_pad - n) * jnp.exp(jnp.float32(-inv_t))
    den_i = s_i[:n, 0] - pad_corr
    den_j = s_jself[:n, 0] + s_jcross.sum(axis=(0, 2)).reshape(n_pad)[:n] - pad_corr
    lse_i = inv_t + jnp.log(den_i)
    lse_j = inv_t + jnp.log(den_j)
    return jnp.mean(lse_i - diag) + jnp.mean(lse_j - diag)


def _reference_loss(z_i, z_j):
    """Pure-JAX reference mirroring the PyTorch module (f32, exact matmuls)."""
    z_i = z_i.astype(jnp.float32)
    z_j = z_j.astype(jnp.float32)
    n = z_i.shape[0]
    hp = jax.lax.Precision.HIGHEST
    z_i = z_i / jnp.maximum(jnp.linalg.norm(z_i, axis=-1, keepdims=True), EPS)
    z_j = z_j / jnp.maximum(jnp.linalg.norm(z_j, axis=-1, keepdims=True), EPS)
    sim_zii = jnp.einsum("nd,md->nm", z_i, z_i, precision=hp) / TEMPERATURE - 1e8 * jnp.eye(n)
    sim_zjj = jnp.einsum("nd,md->nm", z_j, z_j, precision=hp) / TEMPERATURE - 1e8 * jnp.eye(n)
    sim_zij = jnp.einsum("nd,md->nm", z_i, z_j, precision=hp) / TEMPERATURE
    idx = jnp.arange(n)

    def ce(logits):
        lse = jax.nn.logsumexp(logits, axis=-1)
        return jnp.mean(lse - logits[idx, idx])

    loss_i = ce(jnp.concatenate([sim_zij, sim_zii], axis=1))
    loss_j = ce(jnp.concatenate([sim_zij.T, sim_zjj], axis=1))
    return loss_i + loss_j


if __name__ == "__main__":
    key = jax.random.PRNGKey(0)
    k1, k2, k3, k4 = jax.random.split(key, 4)

    # Small case consistent with the module: batch of 8 embeddings, hidden=32.
    N, D = 8, 32
    z_i = jax.random.normal(k1, (N, D), dtype=jnp.float32)
    z_j = jax.random.normal(k2, (N, D), dtype=jnp.float32)
    ref = jax.block_until_ready(_reference_loss(z_i, z_j))

    # Default (bf16 MXU operand) fast path: bf16 rounding of the logits gives ~1e-3
    # relative error on the loss (expected precision trade, per review).
    loss_bf16 = jax.block_until_ready(ntxent_loss(z_i, z_j))
    assert jnp.allclose(loss_bf16, ref, rtol=2e-2, atol=2e-2), (loss_bf16, ref)

    # Near-exact f32-MXU path.
    loss_f32 = jax.block_until_ready(ntxent_loss(z_i, z_j, mxu_dtype=jnp.float32))
    assert jnp.allclose(loss_f32, ref, rtol=1e-4, atol=1e-4), (loss_f32, ref)

    # Larger case exercising a 2x2 tile grid, diagonal-tile masking and row padding.
    N2, D2 = 200, 40
    z_i2 = jax.random.normal(k3, (N2, D2), dtype=jnp.float32)
    z_j2 = jax.random.normal(k4, (N2, D2), dtype=jnp.float32)
    ref2 = jax.block_until_ready(_reference_loss(z_i2, z_j2))

    loss2_bf16 = jax.block_until_ready(ntxent_loss(z_i2, z_j2, block_n=128))
    assert jnp.allclose(loss2_bf16, ref2, rtol=2e-2, atol=2e-2), (loss2_bf16, ref2)

    loss2_f32 = jax.block_until_ready(
        ntxent_loss(z_i2, z_j2, block_n=128, mxu_dtype=jnp.float32))
    assert jnp.allclose(loss2_f32, ref2, rtol=1e-4, atol=1e-4), (loss2_f32, ref2)

    print("KERNEL_OK")
</pallas_src>

<mosaic_0001>
module attributes {stable_mosaic.version = 11 : i64} {
  func.func @_ntxent_kernel(%arg0: i32, %arg1: i32, %arg2: memref<256x128xbf16, #tpu.memory_space<vmem>>, %arg3: memref<256x128xbf16, #tpu.memory_space<vmem>>, %arg4: memref<128x1xf32, #tpu.memory_space<vmem>>, %arg5: memref<128x1xf32, #tpu.memory_space<vmem>>, %arg6: memref<1x1x8x128xf32, #tpu.memory_space<vmem>>, %arg7: memref<128x128xf32, #tpu.memory_space<vmem>>, %arg8: memref<128x128xf32, #tpu.memory_space<vmem>>) attributes {dimension_semantics = [#tpu.dimension_semantics<parallel>, #tpu.dimension_semantics<arbitrary>], iteration_bounds = array<i64: 1, 1>, scalar_prefetch = 0 : i64, scratch_operands = 2 : i64, tpu.core_type = #tpu.core_type<tc>, window_params = [{transform_indices = @transform_0, window_bounds = array<i64: 256, 128>}, {transform_indices = @transform_1, window_bounds = array<i64: 256, 128>}, {transform_indices = @transform_2, window_bounds = array<i64: 128, 1>}, {transform_indices = @transform_3, window_bounds = array<i64: 128, 1>}, {transform_indices = @transform_4, window_bounds = array<i64: 1, 1, 8, 128>}]} {
    %c0_i32 = arith.constant 0 : i32
    %0 = arith.cmpi eq, %arg1, %c0_i32 : i32
    %1 = arith.extui %0 : i1 to i32
    %c0_i32_0 = arith.constant 0 : i32
    %2 = arith.cmpi ne, %1, %c0_i32_0 : i32
    scf.if %2 {
      %cst_19 = arith.constant 0.000000e+00 : f32
      %64 = vector.broadcast %cst_19 : f32 to vector<128x128xf32>
      %c0_20 = arith.constant 0 : index
      %c0_21 = arith.constant 0 : index
      %65 = vector.load %arg7[%c0_20, %c0_21] : memref<128x128xf32, #tpu.memory_space<vmem>>, vector<128x128xf32>
      tpu.vector_store %arg7[%c0_20, %c0_21], %64 {strides = array<i32>} : memref<128x128xf32, #tpu.memory_space<vmem>>, vector<128x128xf32>,
      %cst_22 = arith.constant 0.000000e+00 : f32
      %66 = vector.broadcast %cst_22 : f32 to vector<128x128xf32>
      %c0_23 = arith.constant 0 : index
      %c0_24 = arith.constant 0 : index
      %67 = vector.load %arg8[%c0_23, %c0_24] : memref<128x128xf32, #tpu.memory_space<vmem>>, vector<128x128xf32>
      tpu.vector_store %arg8[%c0_23, %c0_24], %66 {strides = array<i32>} : memref<128x128xf32, #tpu.memory_space<vmem>>, vector<128x128xf32>,
    } else {
    }
    %c0 = arith.constant 0 : index
    %c0_1 = arith.constant 0 : index
    %3 = vector.load %arg2[%c0, %c0_1] : memref<256x128xbf16, #tpu.memory_space<vmem>>, vector<256x128xbf16>
    %c0_2 = arith.constant 0 : index
    %c0_3 = arith.constant 0 : index
    %4 = vector.load %arg3[%c0_2, %c0_3] : memref<256x128xbf16, #tpu.memory_space<vmem>>, vector<256x128xbf16>
    %5 = vector.extract_strided_slice %3 {offsets = [0, 0], sizes = [128, 128], strides = [1, 1]} : vector<256x128xbf16> to vector<128x128xbf16>
    %6 = vector.extract_strided_slice %3 {offsets = [128, 0], sizes = [128, 128], strides = [1, 1]} : vector<256x128xbf16> to vector<128x128xbf16>
    %7 = vector.extract_strided_slice %4 {offsets = [128, 0], sizes = [128, 128], strides = [1, 1]} : vector<256x128xbf16> to vector<128x128xbf16>
    %cst = arith.constant dense<0.000000e+00> : vector<128x256xf32>
    %8 = tpu.matmul %5, %4, %cst {dimension_numbers = #tpu.dot_dimension_numbers<[1], [1], [0], [0], [0, 0, 1, 0], [], []>} : vector<128x128xbf16>, vector<256x128xbf16>, vector<128x256xf32> -> vector<128x256xf32>
    %cst_4 = arith.constant dense<0.000000e+00> : vector<128x128xf32>
    %9 = tpu.matmul %6, %7, %cst_4 {dimension_numbers = #tpu.dot_dimension_numbers<[1], [1], [0], [0], [0, 0, 1, 0], [], []>} : vector<128x128xbf16>, vector<128x128xbf16>, vector<128x128xf32> -> vector<128x128xf32>
    %cst_5 = arith.constant 1.000000e+01 : f32
    %10 = vector.broadcast %cst_5 : f32 to vector<128x256xf32>
    %11 = arith.subf %8, %10 : vector<128x256xf32>
    %12 = math.exp %11 : vector<128x256xf32>
    %cst_6 = arith.constant 1.000000e+01 : f32
    %13 = vector.broadcast %cst_6 : f32 to vector<128x128xf32>
    %14 = arith.subf %9, %13 : vector<128x128xf32>
    %15 = math.exp %14 : vector<128x128xf32>
    %16 = vector.extract_strided_slice %12 {offsets = [0, 0], sizes = [128, 128], strides = [1, 1]} : vector<128x256xf32> to vector<128x128xf32>
    %17 = vector.extract_strided_slice %12 {offsets = [0, 128], sizes = [128, 128], strides = [1, 1]} : vector<128x256xf32> to vector<128x128xf32>
    %18 = vector.extract_strided_slice %17 {offsets = [0, 0], sizes = [8, 128], strides = [1, 1]} : vector<128x128xf32> to vector<8x128xf32>
    %19 = vector.extract_strided_slice %17 {offsets = [8, 0], sizes = [8, 128], strides = [1, 1]} : vector<128x128xf32> to vector<8x128xf32>
    %20 = arith.addf %18, %19 : vector<8x128xf32>
    %21 = vector.extract_strided_slice %17 {offsets = [16, 0], sizes = [8, 128], strides = [1, 1]} : vector<128x128xf32> to vector<8x128xf32>
    %22 = arith.addf %20, %21 : vector<8x128xf32>
    %23 = vector.extract_strided_slice %17 {offsets = [24, 0], sizes = [8, 128], strides = [1, 1]} : vector<128x128xf32> to vector<8x128xf32>
    %24 = arith.addf %22, %23 : vector<8x128xf32>
    %25 = vector.extract_strided_slice %17 {offsets = [32, 0], sizes = [8, 128], strides = [1, 1]} : vector<128x128xf32> to vector<8x128xf32>
    %26 = arith.addf %24, %25 : vector<8x128xf32>
    %27 = vector.extract_strided_slice %17 {offsets = [40, 0], sizes = [8, 128], strides = [1, 1]} : vector<128x128xf32> to vector<8x128xf32>
    %28 = arith.addf %26, %27 : vector<8x128xf32>
    %29 = vector.extract_strided_slice %17 {offsets = [48, 0], sizes = [8, 128], strides = [1, 1]} : vector<128x128xf32> to vector<8x128xf32>
    %30 = arith.addf %28, %29 : vector<8x128xf32>
    %31 = vector.extract_strided_slice %17 {offsets = [56, 0], sizes = [8, 128], strides = [1, 1]} : vector<128x128xf32> to vector<8x128xf32>
    %32 = arith.addf %30, %31 : vector<8x128xf32>
    %33 = vector.extract_strided_slice %17 {offsets = [64, 0], sizes = [8, 128], strides = [1, 1]} : vector<128x128xf32> to vector<8x128xf32>
    %34 = arith.addf %32, %33 : vector<8x128xf32>
    %35 = vector.extract_strided_slice %17 {offsets = [72, 0], sizes = [8, 128], strides = [1, 1]} : vector<128x128xf32> to vector<8x128xf32>
    %36 = arith.addf %34, %35 : vector<8x128xf32>
    %37 = vector.extract_strided_slice %17 {offsets = [80, 0], sizes = [8, 128], strides = [1, 1]} : vector<128x128xf32> to vector<8x128xf32>
    %38 = arith.addf %36, %37 : vector<8x128xf32>
    %39 = vector.extract_strided_slice %17 {offsets = [88, 0], sizes = [8, 128], strides = [1, 1]} : vector<128x128xf32> to vector<8x128xf32>
    %40 = arith.addf %38, %39 : vector<8x128xf32>
    %41 = vector.extract_strided_slice %17 {offsets = [96, 0], sizes = [8, 128], strides = [1, 1]} : vector<128x128xf32> to vector<8x128xf32>
    %42 = arith.addf %40, %41 : vector<8x128xf32>
    %43 = vector.extract_strided_slice %17 {offsets = [104, 0], sizes = [8, 128], strides = [1, 1]} : vector<128x128xf32> to vector<8x128xf32>
    %44 = arith.addf %42, %43 : vector<8x128xf32>
    %45 = vector.extract_strided_slice %17 {offsets = [112, 0], sizes = [8, 128], strides = [1, 1]} : vector<128x128xf32> to vector<8x128xf32>
    %46 = arith.addf %44, %45 : vector<8x128xf32>
    %47 = vector.extract_strided_slice %17 {offsets = [120, 0], sizes = [8, 128], strides = [1, 1]} : vector<128x128xf32> to vector<8x128xf32>
    %48 = arith.addf %46, %47 : vector<8x128xf32>
    %c0_7 = arith.constant 0 : index
    %c0_8 = arith.constant 0 : index
    %c0_9 = arith.constant 0 : index
    %c0_10 = arith.constant 0 : index
    %49 = vector.load %arg6[%c0_7, %c0_8, %c0_9, %c0_10] : memref<1x1x8x128xf32, #tpu.memory_space<vmem>>, vector<1x1x8x128xf32>
    %50 = vector.shape_cast %49 : vector<1x1x8x128xf32> to vector<8x128xf32>
    %51 = vector.shape_cast %48 : vector<8x128xf32> to vector<1x1x8x128xf32>
    tpu.vector_store %arg6[%c0_7, %c0_8, %c0_9, %c0_10], %51 {strides = array<i32>} : memref<1x1x8x128xf32, #tpu.memory_space<vmem>>, vector<1x1x8x128xf32>,
    %c0_11 = arith.constant 0 : index
    %c0_12 = arith.constant 0 : index
    %52 = vector.load %arg7[%c0_11, %c0_12] : memref<128x128xf32, #tpu.memory_space<vmem>>, vector<128x128xf32>
    %53 = arith.addf %52, %17 : vector<128x128xf32>
    %c0_13 = arith.constant 0 : index
    %c0_14 = arith.constant 0 : index
    %54 = vector.load %arg7[%c0_13, %c0_14] : memref<128x128xf32, #tpu.memory_space<vmem>>, vector<128x128xf32>
    tpu.vector_store %arg7[%c0_13, %c0_14], %53 {strides = array<i32>} : memref<128x128xf32, #tpu.memory_space<vmem>>, vector<128x128xf32>,
    %55 = arith.cmpi ne, %arg0, %arg1 : i32
    %56 = arith.extui %55 : i1 to i32
    %c0_i32_15 = arith.constant 0 : i32
    %57 = arith.cmpi ne, %56, %c0_i32_15 : i32
    scf.if %57 {
      %c0_19 = arith.constant 0 : index
      %c0_20 = arith.constant 0 : index
      %64 = vector.load %arg7[%c0_19, %c0_20] : memref<128x128xf32, #tpu.memory_space<vmem>>, vector<128x128xf32>
      %65 = arith.addf %64, %16 : vector<128x128xf32>
      %c0_21 = arith.constant 0 : index
      %c0_22 = arith.constant 0 : index
      %66 = vector.load %arg7[%c0_21, %c0_22] : memref<128x128xf32, #tpu.memory_space<vmem>>, vector<128x128xf32>
      tpu.vector_store %arg7[%c0_21, %c0_22], %65 {strides = array<i32>} : memref<128x128xf32, #tpu.memory_space<vmem>>, vector<128x128xf32>,
      %c0_23 = arith.constant 0 : index
      %c0_24 = arith.constant 0 : index
      %67 = vector.load %arg8[%c0_23, %c0_24] : memref<128x128xf32, #tpu.memory_space<vmem>>, vector<128x128xf32>
      %68 = arith.addf %67, %15 : vector<128x128xf32>
      %c0_25 = arith.constant 0 : index
      %c0_26 = arith.constant 0 : index
      %69 = vector.load %arg8[%c0_25, %c0_26] : memref<128x128xf32, #tpu.memory_space<vmem>>, vector<128x128xf32>
      tpu.vector_store %arg8[%c0_25, %c0_26], %68 {strides = array<i32>} : memref<128x128xf32, #tpu.memory_space<vmem>>, vector<128x128xf32>,
    } else {
    }
    %58 = arith.cmpi eq, %arg0, %arg1 : i32
    %59 = arith.extui %58 : i1 to i32
    %c0_i32_16 = arith.constant 0 : i32
    %60 = arith.cmpi ne, %59, %c0_i32_16 : i32
    scf.if %60 {
      %64 = tpu.iota {dimensions = array<i32: 0>} : vector<128x128xi32>
      %65 = tpu.iota {dimensions = array<i32: 1>} : vector<128x128xi32>
      %66 = arith.cmpi ne, %64, %65 : vector<128x128xi32>
      %c0_19 = arith.constant 0 : index
      %c0_20 = arith.constant 0 : index
      %67 = vector.load %arg7[%c0_19, %c0_20] : memref<128x128xf32, #tpu.memory_space<vmem>>, vector<128x128xf32>
      %cst_21 = arith.constant 0.000000e+00 : f32
      %68 = vector.broadcast %cst_21 : f32 to vector<128x128xf32>
      %69 = arith.select %66, %16, %68 : vector<128x128xi1>, vector<128x128xf32>
      %70 = arith.addf %67, %69 : vector<128x128xf32>
      %c0_22 = arith.constant 0 : index
      %c0_23 = arith.constant 0 : index
      %71 = vector.load %arg7[%c0_22, %c0_23] : memref<128x128xf32, #tpu.memory_space<vmem>>, vector<128x128xf32>
      tpu.vector_store %arg7[%c0_22, %c0_23], %70 {strides = array<i32>} : memref<128x128xf32, #tpu.memory_space<vmem>>, vector<128x128xf32>,
      %c0_24 = arith.constant 0 : index
      %c0_25 = arith.constant 0 : index
      %72 = vector.load %arg8[%c0_24, %c0_25] : memref<128x128xf32, #tpu.memory_space<vmem>>, vector<128x128xf32>
      %cst_26 = arith.constant 0.000000e+00 : f32
      %73 = vector.broadcast %cst_26 : f32 to vector<128x128xf32>
      %74 = arith.select %66, %15, %73 : vector<128x128xi1>, vector<128x128xf32>
      %75 = arith.addf %72, %74 : vector<128x128xf32>
      %c0_27 = arith.constant 0 : index
      %c0_28 = arith.constant 0 : index
      %76 = vector.load %arg8[%c0_27, %c0_28] : memref<128x128xf32, #tpu.memory_space<vmem>>, vector<128x128xf32>
      tpu.vector_store %arg8[%c0_27, %c0_28], %75 {strides = array<i32>} : memref<128x128xf32, #tpu.memory_space<vmem>>, vector<128x128xf32>,
    } else {
    }
    %c0_i32_17 = arith.constant 0 : i32
    %61 = arith.cmpi eq, %arg1, %c0_i32_17 : i32
    %62 = arith.extui %61 : i1 to i32
    %c0_i32_18 = arith.constant 0 : i32
    %63 = arith.cmpi ne, %62, %c0_i32_18 : i32
    scf.if %63 {
      %c0_19 = arith.constant 0 : index
      %c0_20 = arith.constant 0 : index
      %64 = vector.load %arg7[%c0_19, %c0_20] : memref<128x128xf32, #tpu.memory_space<vmem>>, vector<128x128xf32>
      %cst_21 = arith.constant dense<0.000000e+00> : vector<128xf32>
      %65 = vector.multi_reduction <add>, %64, %cst_21 [1] : vector<128x128xf32> to vector<128xf32>
      %66 = vector.shape_cast %65 : vector<128xf32> to vector<128x1xf32>
      %c0_22 = arith.constant 0 : index
      %c0_23 = arith.constant 0 : index
      %67 = vector.load %arg4[%c0_22, %c0_23] : memref<128x1xf32, #tpu.memory_space<vmem>>, vector<128x1xf32>
      tpu.vector_store %arg4[%c0_22, %c0_23], %66 {strides = array<i32>} : memref<128x1xf32, #tpu.memory_space<vmem>>, vector<128x1xf32>,
      %c0_24 = arith.constant 0 : index
      %c0_25 = arith.constant 0 : index
      %68 = vector.load %arg8[%c0_24, %c0_25] : memref<128x128xf32, #tpu.memory_space<vmem>>, vector<128x128xf32>
      %cst_26 = arith.constant dense<0.000000e+00> : vector<128xf32>
      %69 = vector.multi_reduction <add>, %68, %cst_26 [1] : vector<128x128xf32> to vector<128xf32>
      %70 = vector.shape_cast %69 : vector<128xf32> to vector<128x1xf32>
      %c0_27 = arith.constant 0 : index
      %c0_28 = arith.constant 0 : index
      %71 = vector.load %arg5[%c0_27, %c0_28] : memref<128x1xf32, #tpu.memory_space<vmem>>, vector<128x1xf32>
      tpu.vector_store %arg5[%c0_27, %c0_28], %70 {strides = array<i32>} : memref<128x1xf32, #tpu.memory_space<vmem>>, vector<128x1xf32>,
    } else {
    }
    return
  }
  func.func @transform_0(%arg0: i32, %arg1: i32) -> (i32, i32) {
    %c0_i32 = arith.constant 0 : i32
    %c0_i32_0 = arith.constant 0 : i32
    return %arg0, %c0_i32 : i32, i32
  }
  func.func @transform_1(%arg0: i32, %arg1: i32) -> (i32, i32) {
    %c0_i32 = arith.constant 0 : i32
    %c0_i32_0 = arith.constant 0 : i32
    return %arg1, %c0_i32 : i32, i32
  }
  func.func @transform_2(%arg0: i32, %arg1: i32) -> (i32, i32) {
    %c0_i32 = arith.constant 0 : i32
    %c0_i32_0 = arith.constant 0 : i32
    return %arg0, %c0_i32 : i32, i32
  }
  func.func @transform_3(%arg0: i32, %arg1: i32) -> (i32, i32) {
    %c0_i32 = arith.constant 0 : i32
    %c0_i32_0 = arith.constant 0 : i32
    return %arg0, %c0_i32 : i32, i32
  }
  func.func @transform_4(%arg0: i32, %arg1: i32) -> (i32, i32, i32, i32) {
    %c0_i32 = arith.constant 0 : i32
    %c0_i32_0 = arith.constant 0 : i32
    %c0_i32_1 = arith.constant 0 : i32
    return %arg0, %arg1, %c0_i32, %c0_i32_0 : i32, i32, i32, i32
  }
}

</mosaic_0001>

<llo_original>
// kernel: tpu_custom_call.1
$region0: #{tpu_custom_call.1}
  #allocation0 [shape = 'u32[]', space=smem, size = 0x4, offset = 0x4, fixed_abs, tag = 'smem constant byte address 0x4 - core index']
  #allocation1 [shape = 'u32[144,128]{1,0:T(1,128)}', space=vmem, size = 0x12000, scoped, tag = 'internal scratch']
  #allocation2 [shape = 'f32[128,128]{1,0:T(8,128)}', space=vmem, size = 0x10000, scoped, tag = 'scratch operand']
  #allocation3 [shape = 'f32[128,128]{1,0:T(8,128)}', space=vmem, size = 0x10000, scoped, tag = 'scratch operand']
  %s0 = inlined_call_operand.hbm [shape: bf16[256,128], index: 0, kind: input, shape index: {}]
  %s1 = inlined_call_operand.hbm [shape: bf16[256,128], index: 1, kind: input, shape index: {}]
  %s2 = inlined_call_operand.vmem [shape: f32[128,1], index: 2, kind: output, shape index: {0}]
  %s3 = inlined_call_operand.vmem [shape: f32[128,1], index: 3, kind: output, shape index: {1}]
  %s4 = inlined_call_operand.hbm [shape: f32[1,1,8,128], index: 4, kind: output, shape index: {2}]
  %5 = xla_tuple %s2, %s3, %s4
  %s6 = sld [smem:[#allocation0]]
  $region58: #{tpu_custom_call.1} parent=0
    _
  %s8 = ssub.s32 1, %s6
  %s9 = scalar_select 0, %s8, %s6
  $region1: #{tpu_custom_call.1} parent=0
    #allocation4 [shape = 'u8[65536]{0}', space=vmem, size = 0x10000, scoped, tag = 'input window, operand 0, single buffered']
    #allocation5 [shape = 's32[1]{0}', space=sflag, size = 0x4, scoped, tag = 'scoped memory for tpu_custom_call.1']
    #allocation6 [shape = 's32[1]{0}', space=sflag, size = 0x4, scoped, tag = 'scoped memory for tpu_custom_call.1']
    #allocation7 [shape = 'u8[65536]{0}', space=vmem, size = 0x10000, scoped, tag = 'input window, operand 1, single buffered']
    #allocation8 [shape = 's32[1]{0}', space=sflag, size = 0x4, scoped, tag = 'scoped memory for tpu_custom_call.1']
    #allocation9 [shape = 'u8[4096]{0}', space=vmem, size = 0x1000, scoped, tag = 'output window, operand 2, single buffered']
    %10 = vsyncpa [#allocation5], 0
    %11 = vsyncpa [#allocation8], 0
    %12 = vsyncpa [#allocation6], 0
    // Predicated region
    $region2: #{tpu_custom_call.1} parent=1 // pred_check
      _
    $region3: #{tpu_custom_call.1} parent=1 // pred_check_branch
      %14 = sbr.rel (0) target = $region5
    $region4: #{tpu_custom_call.1} parent=1 // pred_region
      %s16 = ssub.s32 2048, 2048
      %17 = vsyncadd [#allocation5], %s16
      %s18 = sshll.u32 [#allocation4], 4
      %s19 = int_to_ptr.vmem [resolvable:$true] %s18
      %24 = dma.hbm_to_vmem [thread:$0]  %s0, 2048, %s19, [#allocation5], 64, 64, 4
    $region5: #{tpu_custom_call.1} parent=1 // pred_fallthru
      _
    // Predicated region
    $region6: #{tpu_custom_call.1} parent=1 // pred_check
      _
    $region7: #{tpu_custom_call.1} parent=1 // pred_check_branch
      %26 = sbr.rel (0) target = $region9
    $region8: #{tpu_custom_call.1} parent=1 // pred_region
      %s28 = ssub.s32 2048, 2048
      %29 = vsyncadd [#allocation8], %s28
      %s30 = sshll.u32 [#allocation7], 4
      %s31 = int_to_ptr.vmem [resolvable:$true] %s30
      %36 = dma.hbm_to_vmem [thread:$0]  %s1, 2048, %s31, [#allocation8], 64, 64, 4
    $region9: #{tpu_custom_call.1} parent=1 // pred_fallthru
      _
    // Predicated region
    $region10: #{tpu_custom_call.1} parent=1 // pred_check
      _
    $region11: #{tpu_custom_call.1} parent=1 // pred_check_branch
      %38 = sbr.rel (0) target = $region13
    $region12: #{tpu_custom_call.1} parent=1 // pred_region
      %39 = dma.done [#allocation5], 2048
    $region13: #{tpu_custom_call.1} parent=1 // pred_fallthru
      _
    // Predicated region
    $region14: #{tpu_custom_call.1} parent=1 // pred_check
      _
    $region15: #{tpu_custom_call.1} parent=1 // pred_check_branch
      %41 = sbr.rel (0) target = $region17
    $region16: #{tpu_custom_call.1} parent=1 // pred_region
      %42 = dma.done [#allocation8], 2048
    $region17: #{tpu_custom_call.1} parent=1 // pred_fallthru
      _
    %p44 = scmp.eq.s32.totalorder 0, 0
    // Predicated region
    $region18: #{tpu_custom_call.1} parent=1 // pred_check
      %p45 = pneg %p44
    $region19: #{tpu_custom_call.1} parent=1 // pred_check_branch
      %47 = sbr.rel (%p45) target = $region21
    $region20: #{tpu_custom_call.1} parent=1 // pred_region
      %48 = vst [vmem:[#allocation2] sm:$0xff] 0.0
      %49 = vst [vmem:[#allocation2 + $0x8] sm:$0xff] 0.0
      %50 = vst [vmem:[#allocation2 + $0x10] sm:$0xff] 0.0
      %51 = vst [vmem:[#allocation2 + $0x18] sm:$0xff] 0.0
      %52 = vst [vmem:[#allocation2 + $0x20] sm:$0xff] 0.0
      %53 = vst [vmem:[#allocation2 + $0x28] sm:$0xff] 0.0
      %54 = vst [vmem:[#allocation2 + $0x30] sm:$0xff] 0.0
      %55 = vst [vmem:[#allocation2 + $0x38] sm:$0xff] 0.0
      %56 = vst [vmem:[#allocation2 + $0x40] sm:$0xff] 0.0
      %57 = vst [vmem:[#allocation2 + $0x48] sm:$0xff] 0.0
      %58 = vst [vmem:[#allocation2 + $0x50] sm:$0xff] 0.0
      %59 = vst [vmem:[#allocation2 + $0x58] sm:$0xff] 0.0
      %60 = vst [vmem:[#allocation2 + $0x60] sm:$0xff] 0.0
      %61 = vst [vmem:[#allocation2 + $0x68] sm:$0xff] 0.0
      %62 = vst [vmem:[#allocation2 + $0x70] sm:$0xff] 0.0
      %63 = vst [vmem:[#allocation2 + $0x78] sm:$0xff] 0.0
      %64 = vst [vmem:[#allocation3] sm:$0xff] 0.0
      %65 = vst [vmem:[#allocation3 + $0x8] sm:$0xff] 0.0
      %66 = vst [vmem:[#allocation3 + $0x10] sm:$0xff] 0.0
      %67 = vst [vmem:[#allocation3 + $0x18] sm:$0xff] 0.0
      %68 = vst [vmem:[#allocation3 + $0x20] sm:$0xff] 0.0
      %69 = vst [vmem:[#allocation3 + $0x28] sm:$0xff] 0.0
      %70 = vst [vmem:[#allocation3 + $0x30] sm:$0xff] 0.0
      %71 = vst [vmem:[#allocation3 + $0x38] sm:$0xff] 0.0
      %72 = vst [vmem:[#allocation3 + $0x40] sm:$0xff] 0.0
      %73 = vst [vmem:[#allocation3 + $0x48] sm:$0xff] 0.0
      %74 = vst [vmem:[#allocation3 + $0x50] sm:$0xff] 0.0
      %75 = vst [vmem:[#allocation3 + $0x58] sm:$0xff] 0.0
      %76 = vst [vmem:[#allocation3 + $0x60] sm:$0xff] 0.0
      %77 = vst [vmem:[#allocation3 + $0x68] sm:$0xff] 0.0
      %78 = vst [vmem:[#allocation3 + $0x70] sm:$0xff] 0.0
      %79 = vst [vmem:[#allocation3 + $0x78] sm:$0xff] 0.0
    $region21: #{tpu_custom_call.1} parent=1 // pred_fallthru
      _
    %v80 = vld [vmem:[#allocation4] sm:$0xf]
    %v81 = vld [vmem:[#allocation4 + $0x4] sm:$0xf]
    %v82 = vld [vmem:[#allocation4 + $0x8] sm:$0xf]
    %v83 = vld [vmem:[#allocation4 + $0xc] sm:$0xf]
    %v84 = vld [vmem:[#allocation4 + $0x10] sm:$0xf]
    %v85 = vld [vmem:[#allocation4 + $0x14] sm:$0xf]
    %v86 = vld [vmem:[#allocation4 + $0x18] sm:$0xf]
    %v87 = vld [vmem:[#allocation4 + $0x1c] sm:$0xf]
    %v88 = vld [vmem:[#allocation4 + $0x20] sm:$0xf]
    %v89 = vld [vmem:[#allocation4 + $0x24] sm:$0xf]
    %v90 = vld [vmem:[#allocation4 + $0x28] sm:$0xf]
    %v91 = vld [vmem:[#allocation4 + $0x2c] sm:$0xf]
    %v92 = vld [vmem:[#allocation4 + $0x30] sm:$0xf]
    %v93 = vld [vmem:[#allocation4 + $0x34] sm:$0xf]
    %v94 = vld [vmem:[#allocation4 + $0x38] sm:$0xf]
    %v95 = vld [vmem:[#allocation4 + $0x3c] sm:$0xf]
    %v96 = vld [vmem:[#allocation4 + $0x40] sm:$0xf]
    %v97 = vld [vmem:[#allocation4 + $0x44] sm:$0xf]
    %v98 = vld [vmem:[#allocation4 + $0x48] sm:$0xf]
    %v99 = vld [vmem:[#allocation4 + $0x4c] sm:$0xf]
    %v100 = vld [vmem:[#allocation4 + $0x50] sm:$0xf]
    %v101 = vld [vmem:[#allocation4 + $0x54] sm:$0xf]
    %v102 = vld [vmem:[#allocation4 + $0x58] sm:$0xf]
    %v103 = vld [vmem:[#allocation4 + $0x5c] sm:$0xf]
    %v104 = vld [vmem:[#allocation4 + $0x60] sm:$0xf]
    %v105 = vld [vmem:[#allocation4 + $0x64] sm:$0xf]
    %v106 = vld [vmem:[#allocation4 + $0x68] sm:$0xf]
    %v107 = vld [vmem:[#allocation4 + $0x6c] sm:$0xf]
    %v108 = vld [vmem:[#allocation4 + $0x70] sm:$0xf]
    %v109 = vld [vmem:[#allocation4 + $0x74] sm:$0xf]
    %v110 = vld [vmem:[#allocation4 + $0x78] sm:$0xf]
    %v111 = vld [vmem:[#allocation4 + $0x7c] sm:$0xf]
    %v112 = vld [vmem:[#allocation7] sm:$0xf]
    %v113 = vld [vmem:[#allocation7 + $0x4] sm:$0xf]
    %v114 = vld [vmem:[#allocation7 + $0x8] sm:$0xf]
    %v115 = vld [vmem:[#allocation7 + $0xc] sm:$0xf]
    %v116 = vld [vmem:[#allocation7 + $0x10] sm:$0xf]
    %v117 = vld [vmem:[#allocation7 + $0x14] sm:$0xf]
    %v118 = vld [vmem:[#allocation7 + $0x18] sm:$0xf]
    %v119 = vld [vmem:[#allocation7 + $0x1c] sm:$0xf]
    %v120 = vld [vmem:[#allocation7 + $0x20] sm:$0xf]
    %v121 = vld [vmem:[#allocation7 + $0x24] sm:$0xf]
    %v122 = vld [vmem:[#allocation7 + $0x28] sm:$0xf]
    %v123 = vld [vmem:[#allocation7 + $0x2c] sm:$0xf]
    %v124 = vld [vmem:[#allocation7 + $0x30] sm:$0xf]
    %v125 = vld [vmem:[#allocation7 + $0x34] sm:$0xf]
    %v126 = vld [vmem:[#allocation7 + $0x38] sm:$0xf]
    %v127 = vld [vmem:[#allocation7 + $0x3c] sm:$0xf]
    %v128 = vld [vmem:[#allocation7 + $0x40] sm:$0xf]
    %v129 = vld [vmem:[#allocation7 + $0x44] sm:$0xf]
    %v130 = vld [vmem:[#allocation7 + $0x48] sm:$0xf]
    %v131 = vld [vmem:[#allocation7 + $0x4c] sm:$0xf]
    %v132 = vld [vmem:[#allocation7 + $0x50] sm:$0xf]
    %v133 = vld [vmem:[#allocation7 + $0x54] sm:$0xf]
    %v134 = vld [vmem:[#allocation7 + $0x58] sm:$0xf]
    %v135 = vld [vmem:[#allocation7 + $0x5c] sm:$0xf]
    %v136 = vld [vmem:[#allocation7 + $0x60] sm:$0xf]
    %v137 = vld [vmem:[#allocation7 + $0x64] sm:$0xf]
    %v138 = vld [vmem:[#allocation7 + $0x68] sm:$0xf]
    %v139 = vld [vmem:[#allocation7 + $0x6c] sm:$0xf]
    %v140 = vld [vmem:[#allocation7 + $0x70] sm:$0xf]
    %v141 = vld [vmem:[#allocation7 + $0x74] sm:$0xf]
    %v142 = vld [vmem:[#allocation7 + $0x78] sm:$0xf]
    %v143 = vld [vmem:[#allocation7 + $0x7c] sm:$0xf]
    %v160 = vunpack.c.l.b16 %v80
    %v161 = vunpack.c.l.b16 %v81
    %v162 = vunpack.c.l.b16 %v82
    %v163 = vunpack.c.l.b16 %v83
    %v164 = vunpack.c.l.b16 %v84
    %v165 = vunpack.c.l.b16 %v85
    %v166 = vunpack.c.l.b16 %v86
    %v167 = vunpack.c.l.b16 %v87
    %v168 = vunpack.c.l.b16 %v88
    %v169 = vunpack.c.l.b16 %v89
    %v170 = vunpack.c.l.b16 %v90
    %v171 = vunpack.c.l.b16 %v91
    %v172 = vunpack.c.l.b16 %v92
    %v173 = vunpack.c.l.b16 %v93
    %v174 = vunpack.c.l.b16 %v94
    %v175 = vunpack.c.l.b16 %v95
    %v176 = vpack.c.b16 %v161, %v160
    %v177 = vpack.c.b16 %v163, %v162
    %v178 = vpack.c.b16 %v165, %v164
    %v179 = vpack.c.b16 %v167, %v166
    %v180 = vpack.c.b16 %v169, %v168
    %v181 = vpack.c.b16 %v171, %v170
    %v182 = vpack.c.b16 %v173, %v172
    %v183 = vpack.c.b16 %v175, %v174
    %v224 = vunpack.c.l.b16 %v112
    %v225 = vunpack.c.l.b16 %v113
    %v226 = vunpack.c.l.b16 %v114
    %v227 = vunpack.c.l.b16 %v115
    %v228 = vunpack.c.l.b16 %v116
    %v229 = vunpack.c.l.b16 %v117
    %v230 = vunpack.c.l.b16 %v118
    %v231 = vunpack.c.l.b16 %v119
    %v232 = vunpack.c.l.b16 %v120
    %v233 = vunpack.c.l.b16 %v121
    %v234 = vunpack.c.l.b16 %v122
    %v235 = vunpack.c.l.b16 %v123
    %v236 = vunpack.c.l.b16 %v124
    %v237 = vunpack.c.l.b16 %v125
    %v238 = vunpack.c.l.b16 %v126
    %v239 = vunpack.c.l.b16 %v127
    %v240 = vunpack.c.l.b16 %v128
    %v241 = vunpack.c.l.b16 %v129
    %v242 = vunpack.c.l.b16 %v130
    %v243 = vunpack.c.l.b16 %v131
    %v244 = vunpack.c.l.b16 %v132
    %v245 = vunpack.c.l.b16 %v133
    %v246 = vunpack.c.l.b16 %v134
    %v247 = vunpack.c.l.b16 %v135
    %v248 = vunpack.c.l.b16 %v136
    %v249 = vunpack.c.l.b16 %v137
    %v250 = vunpack.c.l.b16 %v138
    %v251 = vunpack.c.l.b16 %v139
    %v252 = vunpack.c.l.b16 %v140
    %v253 = vunpack.c.l.b16 %v141
    %v254 = vunpack.c.l.b16 %v142
    %v255 = vunpack.c.l.b16 %v143
    %v256 = vpack.c.b16 %v225, %v224
    %v257 = vpack.c.b16 %v227, %v226
    %v258 = vpack.c.b16 %v229, %v228
    %v259 = vpack.c.b16 %v231, %v230
    %v260 = vpack.c.b16 %v233, %v232
    %v261 = vpack.c.b16 %v235, %v234
    %v262 = vpack.c.b16 %v237, %v236
    %v263 = vpack.c.b16 %v239, %v238
    %v264 = vpack.c.b16 %v241, %v240
    %v265 = vpack.c.b16 %v243, %v242
    %v266 = vpack.c.b16 %v245, %v244
    %v267 = vpack.c.b16 %v247, %v246
    %v268 = vpack.c.b16 %v249, %v248
    %v269 = vpack.c.b16 %v251, %v250
    %v270 = vpack.c.b16 %v253, %v252
    %v271 = vpack.c.b16 %v255, %v254
    %288 = vmatprep.subr.bf16.mxu0 0
    %289 = vmatpush1.bf16.xpose.msra.mxu0 %v256
    %290 = vmatprep.subr.bf16.mxu0 0
    %291 = vmatpush1.bf16.xpose.msra.mxu0 %v257
    %292 = vmatprep.subr.bf16.mxu0 0
    %293 = vmatpush1.bf16.xpose.msra.mxu0 %v258
    %294 = vmatprep.subr.bf16.mxu0 0
    %295 = vmatpush1.bf16.xpose.msra.mxu0 %v259
    %296 = vmatprep.subr.bf16.mxu0 0
    %297 = vmatpush1.bf16.xpose.msra.mxu0 %v260
    %298 = vmatprep.subr.bf16.mxu0 0
    %299 = vmatpush1.bf16.xpose.msra.mxu0 %v261
    %300 = vmatprep.subr.bf16.mxu0 0
    %301 = vmatpush1.bf16.xpose.msra.mxu0 %v262
    %302 = vmatprep.subr.bf16.mxu0 0
    %303 = vmatpush1.bf16.xpose.msra.mxu0 %v263
    %304 = vmatprep.subr.bf16.mxu0 0
    %305 = vmatpush1.bf16.xpose.msra.mxu0 %v264
    %306 = vmatprep.subr.bf16.mxu0 0
    %307 = vmatpush1.bf16.xpose.msra.mxu0 %v265
    %308 = vmatprep.subr.bf16.mxu0 0
    %309 = vmatpush1.bf16.xpose.msra.mxu0 %v266
    %310 = vmatprep.subr.bf16.mxu0 0
    %311 = vmatpush1.bf16.xpose.msra.mxu0 %v267
    %312 = vmatprep.subr.bf16.mxu0 0
    %313 = vmatpush1.bf16.xpose.msra.mxu0 %v268
    %314 = vmatprep.subr.bf16.mxu0 0
    %315 = vmatpush1.bf16.xpose.msra.mxu0 %v269
    %316 = vmatprep.subr.bf16.mxu0 0
    %317 = vmatpush1.bf16.xpose.msra.mxu0 %v270
    %318 = vmatprep.subr.bf16.mxu0 0
    %319 = vmatpush1.bf16.xpose.msra.mxu0 %v271
    %320 = vmatprep.mubr.bf16.mxu0 0
    %321 = vmatmul.mubr.bf16.gmra.mrb[0].mxu0 %v176
    %v322 = vpop.f32.mrb[0].mxu0
    %v323 = vadd.f32 0.0, %v322
    %v324 = vpop.f32.mrb[0].mxu0
    %v325 = vadd.f32 0.0, %v324
    %v326 = vpop.f32.mrb[0].mxu0
    %v327 = vadd.f32 0.0, %v326
    %v328 = vpop.f32.mrb[0].mxu0
    %v329 = vadd.f32 0.0, %v328
    %330 = vmatprep.mubr.bf16.mxu0 0
    %331 = vmatmul.mubr.bf16.gmra.mrb[0].mxu0 %v177
    %v332 = vpop.f32.mrb[0].mxu0
    %v333 = vadd.f32 0.0, %v332
    %v334 = vpop.f32.mrb[0].mxu0
    %v335 = vadd.f32 0.0, %v334
    %v336 = vpop.f32.mrb[0].mxu0
    %v337 = vadd.f32 0.0, %v336
    %v338 = vpop.f32.mrb[0].mxu0
    %v339 = vadd.f32 0.0, %v338
    %340 = vmatprep.mubr.bf16.mxu0 0
    %341 = vmatmul.mubr.bf16.gmra.mrb[0].mxu0 %v178
    %v342 = vpop.f32.mrb[0].mxu0
    %v343 = vadd.f32 0.0, %v342
    %v344 = vpop.f32.mrb[0].mxu0
    %v345 = vadd.f32 0.0, %v344
    %v346 = vpop.f32.mrb[0].mxu0
    %v347 = vadd.f32 0.0, %v346
    %v348 = vpop.f32.mrb[0].mxu0
    %v349 = vadd.f32 0.0, %v348
    %350 = vmatprep.mubr.bf16.mxu0 0
    %351 = vmatmul.mubr.bf16.gmra.mrb[0].mxu0 %v179
    %v352 = vpop.f32.mrb[0].mxu0
    %v353 = vadd.f32 0.0, %v352
    %v354 = vpop.f32.mrb[0].mxu0
    %v355 = vadd.f32 0.0, %v354
    %v356 = vpop.f32.mrb[0].mxu0
    %v357 = vadd.f32 0.0, %v356
    %v358 = vpop.f32.mrb[0].mxu0
    %v359 = vadd.f32 0.0, %v358
    %360 = vmatprep.mubr.bf16.mxu0 0
    %361 = vmatmul.mubr.bf16.gmra.mrb[0].mxu0 %v180
    %v362 = vpop.f32.mrb[0].mxu0
    %v363 = vadd.f32 0.0, %v362
    %v364 = vpop.f32.mrb[0].mxu0
    %v365 = vadd.f32 0.0, %v364
    %v366 = vpop.f32.mrb[0].mxu0
    %v367 = vadd.f32 0.0, %v366
    %v368 = vpop.f32.mrb[0].mxu0
    %v369 = vadd.f32 0.0, %v368
    %370 = vmatprep.mubr.bf16.mxu0 0
    %371 = vmatmul.mubr.bf16.gmra.mrb[0].mxu0 %v181
    %v372 = vpop.f32.mrb[0].mxu0
    %v373 = vadd.f32 0.0, %v372
    %v374 = vpop.f32.mrb[0].mxu0
    %v375 = vadd.f32 0.0, %v374
    %v376 = vpop.f32.mrb[0].mxu0
    %v377 = vadd.f32 0.0, %v376
    %v378 = vpop.f32.mrb[0].mxu0
    %v379 = vadd.f32 0.0, %v378
    %380 = vmatprep.mubr.bf16.mxu0 0
    %381 = vmatmul.mubr.bf16.gmra.mrb[0].mxu0 %v182
    %v382 = vpop.f32.mrb[0].mxu0
    %v383 = vadd.f32 0.0, %v382
    %v384 = vpop.f32.mrb[0].mxu0
    %v385 = vadd.f32 0.0, %v384
    %v386 = vpop.f32.mrb[0].mxu0
    %v387 = vadd.f32 0.0, %v386
    %v388 = vpop.f32.mrb[0].mxu0
    %v389 = vadd.f32 0.0, %v388
    %390 = vmatprep.mubr.bf16.mxu0 0
    %391 = vmatmul.mubr.bf16.gmra.mrb[0].mxu0 %v183
    %v392 = vpop.f32.mrb[0].mxu0
    %v393 = vadd.f32 0.0, %v392
    %v394 = vpop.f32.mrb[0].mxu0
    %v395 = vadd.f32 0.0, %v394
    %v396 = vpop.f32.mrb[0].mxu0
    %v397 = vadd.f32 0.0, %v396
    %v398 = vpop.f32.mrb[0].mxu0
    %v399 = vadd.f32 0.0, %v398
    %400 = vdwg.mxu0
    %v417 = vunpack.c.l.b16 %v96
    %v418 = vunpack.c.l.b16 %v97
    %v419 = vunpack.c.l.b16 %v98
    %v420 = vunpack.c.l.b16 %v99
    %v421 = vunpack.c.l.b16 %v100
    %v422 = vunpack.c.l.b16 %v101
    %v423 = vunpack.c.l.b16 %v102
    %v424 = vunpack.c.l.b16 %v103
    %v425 = vunpack.c.l.b16 %v104
    %v426 = vunpack.c.l.b16 %v105
    %v427 = vunpack.c.l.b16 %v106
    %v428 = vunpack.c.l.b16 %v107
    %v429 = vunpack.c.l.b16 %v108
    %v430 = vunpack.c.l.b16 %v109
    %v431 = vunpack.c.l.b16 %v110
    %v432 = vunpack.c.l.b16 %v111
    %v433 = vpack.c.b16 %v418, %v417
    %v434 = vpack.c.b16 %v420, %v419
    %v435 = vpack.c.b16 %v422, %v421
    %v436 = vpack.c.b16 %v424, %v423
    %v437 = vpack.c.b16 %v426, %v425
    %v438 = vpack.c.b16 %v428, %v427
    %v439 = vpack.c.b16 %v430, %v429
    %v440 = vpack.c.b16 %v432, %v431
    %449 = vmatprep.subr.bf16.mxu0 0
    %450 = vmatpush1.bf16.xpose.msra.mxu0 %v264
    %451 = vmatprep.subr.bf16.mxu0 0
    %452 = vmatpush1.bf16.xpose.msra.mxu0 %v265
    %453 = vmatprep.subr.bf16.mxu0 0
    %454 = vmatpush1.bf16.xpose.msra.mxu0 %v266
    %455 = vmatprep.subr.bf16.mxu0 0
    %456 = vmatpush1.bf16.xpose.msra.mxu0 %v267
    %457 = vmatprep.subr.bf16.mxu0 0
    %458 = vmatpush1.bf16.xpose.msra.mxu0 %v268
    %459 = vmatprep.subr.bf16.mxu0 0
    %460 = vmatpush1.bf16.xpose.msra.mxu0 %v269
    %461 = vmatprep.subr.bf16.mxu0 0
    %462 = vmatpush1.bf16.xpose.msra.mxu0 %v270
    %463 = vmatprep.subr.bf16.mxu0 0
    %464 = vmatpush1.bf16.xpose.msra.mxu0 %v271
    %465 = vmatprep.subr.bf16.mxu0 0
    %466 = vmatpush1.bf16.xpose.msra.mxu0 0
    %467 = vmatprep.subr.bf16.mxu0 0
    %468 = vmatpush1.bf16.xpose.msra.mxu0 0
    %469 = vmatprep.subr.bf16.mxu0 0
    %470 = vmatpush1.bf16.xpose.msra.mxu0 0
    %471 = vmatprep.subr.bf16.mxu0 0
    %472 = vmatpush1.bf16.xpose.msra.mxu0 0
    %473 = vmatprep.subr.bf16.mxu0 0
    %474 = vmatpush1.bf16.xpose.msra.mxu0 0
    %475 = vmatprep.subr.bf16.mxu0 0
    %476 = vmatpush1.bf16.xpose.msra.mxu0 0
    %477 = vmatprep.subr.bf16.mxu0 0
    %478 = vmatpush1.bf16.xpose.msra.mxu0 0
    %479 = vmatprep.subr.bf16.mxu0 0
    %480 = vmatpush1.bf16.xpose.msra.mxu0 0
    %481 = vmatprep.mubr.bf16.mxu0 0
    %482 = vmatmul.mubr.bf16.gmra.mrb[0].mxu0 %v433
    %v483 = vpop.f32.mrb[0].mxu0
    %v484 = vadd.f32 0.0, %v483
    %v485 = vpop.f32.mrb[0].mxu0
    %v486 = vpop.f32.mrb[0].mxu0
    %v487 = vadd.f32 0.0, %v486
    %v488 = vpop.f32.mrb[0].mxu0
    %489 = vmatprep.mubr.bf16.mxu0 0
    %490 = vmatmul.mubr.bf16.gmra.mrb[0].mxu0 %v434
    %v491 = vpop.f32.mrb[0].mxu0
    %v492 = vadd.f32 0.0, %v491
    %v493 = vpop.f32.mrb[0].mxu0
    %v494 = vpop.f32.mrb[0].mxu0
    %v495 = vadd.f32 0.0, %v494
    %v496 = vpop.f32.mrb[0].mxu0
    %497 = vmatprep.mubr.bf16.mxu0 0
    %498 = vmatmul.mubr.bf16.gmra.mrb[0].mxu0 %v435
    %v499 = vpop.f32.mrb[0].mxu0
    %v500 = vadd.f32 0.0, %v499
    %v501 = vpop.f32.mrb[0].mxu0
    %v502 = vpop.f32.mrb[0].mxu0
    %v503 = vadd.f32 0.0, %v502
    %v504 = vpop.f32.mrb[0].mxu0
    %505 = vmatprep.mubr.bf16.mxu0 0
    %506 = vmatmul.mubr.bf16.gmra.mrb[0].mxu0 %v436
    %v507 = vpop.f32.mrb[0].mxu0
    %v508 = vadd.f32 0.0, %v507
    %v509 = vpop.f32.mrb[0].mxu0
    %v510 = vpop.f32.mrb[0].mxu0
    %v511 = vadd.f32 0.0, %v510
    %v512 = vpop.f32.mrb[0].mxu0
    %513 = vmatprep.mubr.bf16.mxu0 0
    %514 = vmatmul.mubr.bf16.gmra.mrb[0].mxu0 %v437
    %v515 = vpop.f32.mrb[0].mxu0
    %v516 = vadd.f32 0.0, %v515
    %v517 = vpop.f32.mrb[0].mxu0
    %v518 = vpop.f32.mrb[0].mxu0
    %v519 = vadd.f32 0.0, %v518
    %v520 = vpop.f32.mrb[0].mxu0
    %521 = vmatprep.mubr.bf16.mxu0 0
    %522 = vmatmul.mubr.bf16.gmra.mrb[0].mxu0 %v438
    %v523 = vpop.f32.mrb[0].mxu0
    %v524 = vadd.f32 0.0, %v523
    %v525 = vpop.f32.mrb[0].mxu0
    %v526 = vpop.f32.mrb[0].mxu0
    %v527 = vadd.f32 0.0, %v526
    %v528 = vpop.f32.mrb[0].mxu0
    %529 = vmatprep.mubr.bf16.mxu0 0
    %530 = vmatmul.mubr.bf16.gmra.mrb[0].mxu0 %v439
    %v531 = vpop.f32.mrb[0].mxu0
    %v532 = vadd.f32 0.0, %v531
    %v533 = vpop.f32.mrb[0].mxu0
    %v534 = vpop.f32.mrb[0].mxu0
    %v535 = vadd.f32 0.0, %v534
    %v536 = vpop.f32.mrb[0].mxu0
    %537 = vmatprep.mubr.bf16.mxu0 0
    %538 = vmatmul.mubr.bf16.gmra.mrb[0].mxu0 %v440
    %v539 = vpop.f32.mrb[0].mxu0
    %v540 = vadd.f32 0.0, %v539
    %v541 = vpop.f32.mrb[0].mxu0
    %v542 = vpop.f32.mrb[0].mxu0
    %v543 = vadd.f32 0.0, %v542
    %v544 = vpop.f32.mrb[0].mxu0
    %545 = vdwg.mxu0
    %v546 = vsub.f32 %v323, 10.0
    %v547 = vsub.f32 %v325, 10.0
    %v548 = vsub.f32 %v327, 10.0
    %v549 = vsub.f32 %v329, 10.0
    %v550 = vsub.f32 %v333, 10.0
    %v551 = vsub.f32 %v335, 10.0
    %v552 = vsub.f32 %v337, 10.0
    %v553 = vsub.f32 %v339, 10.0
    %v554 = vsub.f32 %v343, 10.0
    %v555 = vsub.f32 %v345, 10.0
    %v556 = vsub.f32 %v347, 10.0
    %v557 = vsub.f32 %v349, 10.0
    %v558 = vsub.f32 %v353, 10.0
    %v559 = vsub.f32 %v355, 10.0
    %v560 = vsub.f32 %v357, 10.0
    %v561 = vsub.f32 %v359, 10.0
    %v562 = vsub.f32 %v363, 10.0
    %v563 = vsub.f32 %v365, 10.0
    %v564 = vsub.f32 %v367, 10.0
    %v565 = vsub.f32 %v369, 10.0
    %v566 = vsub.f32 %v373, 10.0
    %v567 = vsub.f32 %v375, 10.0
    %v568 = vsub.f32 %v377, 10.0
    %v569 = vsub.f32 %v379, 10.0
    %v570 = vsub.f32 %v383, 10.0
    %v571 = vsub.f32 %v385, 10.0
    %v572 = vsub.f32 %v387, 10.0
    %v573 = vsub.f32 %v389, 10.0
    %v574 = vsub.f32 %v393, 10.0
    %v575 = vsub.f32 %v395, 10.0
    %v576 = vsub.f32 %v397, 10.0
    %v577 = vsub.f32 %v399, 10.0
    %v578 = vmul.f32 %v546, 1.442695
    %v579 = vpow.pop %v578
    %v580 = vmul.f32 %v547, 1.442695
    %v581 = vpow.pop %v580
    %v582 = vmul.f32 %v548, 1.442695
    %v583 = vpow.pop %v582
    %v584 = vmul.f32 %v549, 1.442695
    %v585 = vpow.pop %v584
    %v586 = vmul.f32 %v550, 1.442695
    %v587 = vpow.pop %v586
    %v588 = vmul.f32 %v551, 1.442695
    %v589 = vpow.pop %v588
    %v590 = vmul.f32 %v552, 1.442695
    %v591 = vpow.pop %v590
    %v592 = vmul.f32 %v553, 1.442695
    %v593 = vpow.pop %v592
    %v594 = vmul.f32 %v554, 1.442695
    %v595 = vpow.pop %v594
    %v596 = vmul.f32 %v555, 1.442695
    %v597 = vpow.pop %v596
    %v598 = vmul.f32 %v556, 1.442695
    %v599 = vpow.pop %v598
    %v600 = vmul.f32 %v557, 1.442695
    %v601 = vpow.pop %v600
    %v602 = vmul.f32 %v558, 1.442695
    %v603 = vpow.pop %v602
    %v604 = vmul.f32 %v559, 1.442695
    %v605 = vpow.pop %v604
    %v606 = vmul.f32 %v560, 1.442695
    %v607 = vpow.pop %v606
    %v608 = vmul.f32 %v561, 1.442695
    %v609 = vpow.pop %v608
    %v610 = vmul.f32 %v562, 1.442695
    %v611 = vpow.pop %v610
    %v612 = vmul.f32 %v563, 1.442695
    %v613 = vpow.pop %v612
    %v614 = vmul.f32 %v564, 1.442695
    %v615 = vpow.pop %v614
    %v616 = vmul.f32 %v565, 1.442695
    %v617 = vpow.pop %v616
    %v618 = vmul.f32 %v566, 1.442695
    %v619 = vpow.pop %v618
    %v620 = vmul.f32 %v567, 1.442695
    %v621 = vpow.pop %v620
    %v622 = vmul.f32 %v568, 1.442695
    %v623 = vpow.pop %v622
    %v624 = vmul.f32 %v569, 1.442695
    %v625 = vpow.pop %v624
    %v626 = vmul.f32 %v570, 1.442695
    %v627 = vpow.pop %v626
    %v628 = vmul.f32 %v571, 1.442695
    %v629 = vpow.pop %v628
    %v630 = vmul.f32 %v572, 1.442695
    %v631 = vpow.pop %v630
    %v632 = vmul.f32 %v573, 1.442695
    %v633 = vpow.pop %v632
    %v634 = vmul.f32 %v574, 1.442695
    %v635 = vpow.pop %v634
    %v636 = vmul.f32 %v575, 1.442695
    %v637 = vpow.pop %v636
    %v638 = vmul.f32 %v576, 1.442695
    %v639 = vpow.pop %v638
    %v640 = vmul.f32 %v577, 1.442695
    %v641 = vpow.pop %v640
    %v642 = vsub.f32 %v484, 10.0
    %v643 = vsub.f32 %v487, 10.0
    %v644 = vsub.f32 %v492, 10.0
    %v645 = vsub.f32 %v495, 10.0
    %v646 = vsub.f32 %v500, 10.0
    %v647 = vsub.f32 %v503, 10.0
    %v648 = vsub.f32 %v508, 10.0
    %v649 = vsub.f32 %v511, 10.0
    %v650 = vsub.f32 %v516, 10.0
    %v651 = vsub.f32 %v519, 10.0
    %v652 = vsub.f32 %v524, 10.0
    %v653 = vsub.f32 %v527, 10.0
    %v654 = vsub.f32 %v532, 10.0
    %v655 = vsub.f32 %v535, 10.0
    %v656 = vsub.f32 %v540, 10.0
    %v657 = vsub.f32 %v543, 10.0
    %v658 = vmul.f32 %v642, 1.442695
    %v659 = vpow.pop %v658
    %v660 = vmul.f32 %v643, 1.442695
    %v661 = vpow.pop %v660
    %v662 = vmul.f32 %v644, 1.442695
    %v663 = vpow.pop %v662
    %v664 = vmul.f32 %v645, 1.442695
    %v665 = vpow.pop %v664
    %v666 = vmul.f32 %v646, 1.442695
    %v667 = vpow.pop %v666
    %v668 = vmul.f32 %v647, 1.442695
    %v669 = vpow.pop %v668
    %v670 = vmul.f32 %v648, 1.442695
    %v671 = vpow.pop %v670
    %v672 = vmul.f32 %v649, 1.442695
    %v673 = vpow.pop %v672
    %v674 = vmul.f32 %v650, 1.442695
    %v675 = vpow.pop %v674
    %v676 = vmul.f32 %v651, 1.442695
    %v677 = vpow.pop %v676
    %v678 = vmul.f32 %v652, 1.442695
    %v679 = vpow.pop %v678
    %v680 = vmul.f32 %v653, 1.442695
    %v681 = vpow.pop %v680
    %v682 = vmul.f32 %v654, 1.442695
    %v683 = vpow.pop %v682
    %v684 = vmul.f32 %v655, 1.442695
    %v685 = vpow.pop %v684
    %v686 = vmul.f32 %v656, 1.442695
    %v687 = vpow.pop %v686
    %v688 = vmul.f32 %v657, 1.442695
    %v689 = vpow.pop %v688
    %v690 = vadd.f32 %v581, %v585
    %v691 = vadd.f32 %v690, %v589
    %v692 = vadd.f32 %v691, %v593
    %v693 = vadd.f32 %v692, %v597
    %v694 = vadd.f32 %v693, %v601
    %v695 = vadd.f32 %v694, %v605
    %v696 = vadd.f32 %v695, %v609
    %v697 = vadd.f32 %v696, %v613
    %v698 = vadd.f32 %v697, %v617
    %v699 = vadd.f32 %v698, %v621
    %v700 = vadd.f32 %v699, %v625
    %v701 = vadd.f32 %v700, %v629
    %v702 = vadd.f32 %v701, %v633
    %v703 = vadd.f32 %v702, %v637
    %v704 = vadd.f32 %v703, %v641
    %705 = vst [vmem:[#allocation9] sm:$0xff] %v704
    %v706 = vld [vmem:[#allocation2] sm:$0xff]
    %v707 = vld [vmem:[#allocation2 + $0x8] sm:$0xff]
    %v708 = vld [vmem:[#allocation2 + $0x10] sm:$0xff]
    %v709 = vld [vmem:[#allocation2 + $0x18] sm:$0xff]
    %v710 = vld [vmem:[#allocation2 + $0x20] sm:$0xff]
    %v711 = vld [vmem:[#allocation2 + $0x28] sm:$0xff]
    %v712 = vld [vmem:[#allocation2 + $0x30] sm:$0xff]
    %v713 = vld [vmem:[#allocation2 + $0x38] sm:$0xff]
    %v714 = vld [vmem:[#allocation2 + $0x40] sm:$0xff]
    %v715 = vld [vmem:[#allocation2 + $0x48] sm:$0xff]
    %v716 = vld [vmem:[#allocation2 + $0x50] sm:$0xff]
    %v717 = vld [vmem:[#allocation2 + $0x58] sm:$0xff]
    %v718 = vld [vmem:[#allocation2 + $0x60] sm:$0xff]
    %v719 = vld [vmem:[#allocation2 + $0x68] sm:$0xff]
    %v720 = vld [vmem:[#allocation2 + $0x70] sm:$0xff]
    %v721 = vld [vmem:[#allocation2 + $0x78] sm:$0xff]
    %v722 = vadd.f32 %v706, %v581
    %v723 = vadd.f32 %v707, %v585
    %v724 = vadd.f32 %v708, %v589
    %v725 = vadd.f32 %v709, %v593
    %v726 = vadd.f32 %v710, %v597
    %v727 = vadd.f32 %v711, %v601
    %v728 = vadd.f32 %v712, %v605
    %v729 = vadd.f32 %v713, %v609
    %v730 = vadd.f32 %v714, %v613
    %v731 = vadd.f32 %v715, %v617
    %v732 = vadd.f32 %v716, %v621
    %v733 = vadd.f32 %v717, %v625
    %v734 = vadd.f32 %v718, %v629
    %v735 = vadd.f32 %v719, %v633
    %v736 = vadd.f32 %v720, %v637
    %v737 = vadd.f32 %v721, %v641
    %738 = vst [vmem:[#allocation2] sm:$0xff] %v722
    %739 = vst [vmem:[#allocation2 + $0x8] sm:$0xff] %v723
    %740 = vst [vmem:[#allocation2 + $0x10] sm:$0xff] %v724
    %741 = vst [vmem:[#allocation2 + $0x18] sm:$0xff] %v725
    %742 = vst [vmem:[#allocation2 + $0x20] sm:$0xff] %v726
    %743 = vst [vmem:[#allocation2 + $0x28] sm:$0xff] %v727
    %744 = vst [vmem:[#allocation2 + $0x30] sm:$0xff] %v728
    %745 = vst [vmem:[#allocation2 + $0x38] sm:$0xff] %v729
    %746 = vst [vmem:[#allocation2 + $0x40] sm:$0xff] %v730
    %747 = vst [vmem:[#allocation2 + $0x48] sm:$0xff] %v731
    %748 = vst [vmem:[#allocation2 + $0x50] sm:$0xff] %v732
    %749 = vst [vmem:[#allocation2 + $0x58] sm:$0xff] %v733
    %750 = vst [vmem:[#allocation2 + $0x60] sm:$0xff] %v734
    %751 = vst [vmem:[#allocation2 + $0x68] sm:$0xff] %v735
    %752 = vst [vmem:[#allocation2 + $0x70] sm:$0xff] %v736
    %753 = vst [vmem:[#allocation2 + $0x78] sm:$0xff] %v737
    %p754 = scmp.ne.s32.totalorder 0, 0
    // Predicated region
    $region22: #{tpu_custom_call.1} parent=1 // pred_check
      %p755 = pneg %p754
    $region23: #{tpu_custom_call.1} parent=1 // pred_check_branch
      %757 = sbr.rel (%p755) target = $region25
    $region24: #{tpu_custom_call.1} parent=1 // pred_region
      %v758 = vld [vmem:[#allocation2] sm:$0xff]
      %v759 = vld [vmem:[#allocation2 + $0x8] sm:$0xff]
      %v760 = vld [vmem:[#allocation2 + $0x10] sm:$0xff]
      %v761 = vld [vmem:[#allocation2 + $0x18] sm:$0xff]
      %v762 = vld [vmem:[#allocation2 + $0x20] sm:$0xff]
      %v763 = vld [vmem:[#allocation2 + $0x28] sm:$0xff]
      %v764 = vld [vmem:[#allocation2 + $0x30] sm:$0xff]
      %v765 = vld [vmem:[#allocation2 + $0x38] sm:$0xff]
      %v766 = vld [vmem:[#allocation2 + $0x40] sm:$0xff]
      %v767 = vld [vmem:[#allocation2 + $0x48] sm:$0xff]
      %v768 = vld [vmem:[#allocation2 + $0x50] sm:$0xff]
      %v769 = vld [vmem:[#allocation2 + $0x58] sm:$0xff]
      %v770 = vld [vmem:[#allocation2 + $0x60] sm:$0xff]
      %v771 = vld [vmem:[#allocation2 + $0x68] sm:$0xff]
      %v772 = vld [vmem:[#allocation2 + $0x70] sm:$0xff]
      %v773 = vld [vmem:[#allocation2 + $0x78] sm:$0xff]
      %v774 = vadd.f32 %v758, %v579
      %v775 = vadd.f32 %v759, %v583
      %v776 = vadd.f32 %v760, %v587
      %v777 = vadd.f32 %v761, %v591
      %v778 = vadd.f32 %v762, %v595
      %v779 = vadd.f32 %v763, %v599
      %v780 = vadd.f32 %v764, %v603
      %v781 = vadd.f32 %v765, %v607
      %v782 = vadd.f32 %v766, %v611
      %v783 = vadd.f32 %v767, %v615
      %v784 = vadd.f32 %v768, %v619
      %v785 = vadd.f32 %v769, %v623
      %v786 = vadd.f32 %v770, %v627
      %v787 = vadd.f32 %v771, %v631
      %v788 = vadd.f32 %v772, %v635
      %v789 = vadd.f32 %v773, %v639
      %790 = vst [vmem:[#allocation2] sm:$0xff] %v774
      %791 = vst [vmem:[#allocation2 + $0x8] sm:$0xff] %v775
      %792 = vst [vmem:[#allocation2 + $0x10] sm:$0xff] %v776
      %793 = vst [vmem:[#allocation2 + $0x18] sm:$0xff] %v777
      %794 = vst [vmem:[#allocation2 + $0x20] sm:$0xff] %v778
      %795 = vst [vmem:[#allocation2 + $0x28] sm:$0xff] %v779
      %796 = vst [vmem:[#allocation2 + $0x30] sm:$0xff] %v780
      %797 = vst [vmem:[#allocation2 + $0x38] sm:$0xff] %v781
      %798 = vst [vmem:[#allocation2 + $0x40] sm:$0xff] %v782
      %799 = vst [vmem:[#allocation2 + $0x48] sm:$0xff] %v783
      %800 = vst [vmem:[#allocation2 + $0x50] sm:$0xff] %v784
      %801 = vst [vmem:[#allocation2 + $0x58] sm:$0xff] %v785
      %802 = vst [vmem:[#allocation2 + $0x60] sm:$0xff] %v786
      %803 = vst [vmem:[#allocation2 + $0x68] sm:$0xff] %v787
      %804 = vst [vmem:[#allocation2 + $0x70] sm:$0xff] %v788
      %805 = vst [vmem:[#allocation2 + $0x78] sm:$0xff] %v789
      %v806 = vld [vmem:[#allocation3] sm:$0xff]
      %v807 = vld [vmem:[#allocation3 + $0x8] sm:$0xff]
      %v808 = vld [vmem:[#allocation3 + $0x10] sm:$0xff]
      %v809 = vld [vmem:[#allocation3 + $0x18] sm:$0xff]
      %v810 = vld [vmem:[#allocation3 + $0x20] sm:$0xff]
      %v811 = vld [vmem:[#allocation3 + $0x28] sm:$0xff]
      %v812 = vld [vmem:[#allocation3 + $0x30] sm:$0xff]
      %v813 = vld [vmem:[#allocation3 + $0x38] sm:$0xff]
      %v814 = vld [vmem:[#allocation3 + $0x40] sm:$0xff]
      %v815 = vld [vmem:[#allocation3 + $0x48] sm:$0xff]
      %v816 = vld [vmem:[#allocation3 + $0x50] sm:$0xff]
      %v817 = vld [vmem:[#allocation3 + $0x58] sm:$0xff]
      %v818 = vld [vmem:[#allocation3 + $0x60] sm:$0xff]
      %v819 = vld [vmem:[#allocation3 + $0x68] sm:$0xff]
      %v820 = vld [vmem:[#allocation3 + $0x70] sm:$0xff]
      %v821 = vld [vmem:[#allocation3 + $0x78] sm:$0xff]
      %v822 = vadd.f32 %v806, %v659
      %v823 = vadd.f32 %v807, %v661
      %v824 = vadd.f32 %v808, %v663
      %v825 = vadd.f32 %v809, %v665
      %v826 = vadd.f32 %v810, %v667
      %v827 = vadd.f32 %v811, %v669
      %v828 = vadd.f32 %v812, %v671
      %v829 = vadd.f32 %v813, %v673
      %v830 = vadd.f32 %v814, %v675
      %v831 = vadd.f32 %v815, %v677
      %v832 = vadd.f32 %v816, %v679
      %v833 = vadd.f32 %v817, %v681
      %v834 = vadd.f32 %v818, %v683
      %v835 = vadd.f32 %v819, %v685
      %v836 = vadd.f32 %v820, %v687
      %v837 = vadd.f32 %v821, %v689
      %838 = vst [vmem:[#allocation3] sm:$0xff] %v822
      %839 = vst [vmem:[#allocation3 + $0x8] sm:$0xff] %v823
      %840 = vst [vmem:[#allocation3 + $0x10] sm:$0xff] %v824
      %841 = vst [vmem:[#allocation3 + $0x18] sm:$0xff] %v825
      %842 = vst [vmem:[#allocation3 + $0x20] sm:$0xff] %v826
      %843 = vst [vmem:[#allocation3 + $0x28] sm:$0xff] %v827
      %844 = vst [vmem:[#allocation3 + $0x30] sm:$0xff] %v828
      %845 = vst [vmem:[#allocation3 + $0x38] sm:$0xff] %v829
      %846 = vst [vmem:[#allocation3 + $0x40] sm:$0xff] %v830
      %847 = vst [vmem:[#allocation3 + $0x48] sm:$0xff] %v831
      %848 = vst [vmem:[#allocation3 + $0x50] sm:$0xff] %v832
      %849 = vst [vmem:[#allocation3 + $0x58] sm:$0xff] %v833
      %850 = vst [vmem:[#allocation3 + $0x60] sm:$0xff] %v834
      %851 = vst [vmem:[#allocation3 + $0x68] sm:$0xff] %v835
      %852 = vst [vmem:[#allocation3 + $0x70] sm:$0xff] %v836
      %853 = vst [vmem:[#allocation3 + $0x78] sm:$0xff] %v837
    $region25: #{tpu_custom_call.1} parent=1 // pred_fallthru
      _
    %p854 = scmp.eq.s32.totalorder 0, 0
    // Predicated region
    $region26: #{tpu_custom_call.1} parent=1 // pred_check
      %p855 = pneg %p854
    $region27: #{tpu_custom_call.1} parent=1 // pred_check_branch
      %857 = sbr.rel (%p855) target = $region29
    $region28: #{tpu_custom_call.1} parent=1 // pred_region
      %v858 = vlaneseq
      %v859 = vshrl.u32 %v858, 7
      %v860 = vadd.s32 %v859, 8
      %v861 = vadd.s32 %v859, 16
      %v862 = vadd.s32 %v859, 24
      %v863 = vadd.s32 %v859, 32
      %v864 = vadd.s32 %v859, 40
      %v865 = vadd.s32 %v859, 48
      %v866 = vadd.s32 %v859, 56
      %v867 = vadd.s32 %v859, 64
      %v868 = vadd.s32 %v859, 72
      %v869 = vadd.s32 %v859, 80
      %v870 = vadd.s32 %v859, 88
      %v871 = vadd.s32 %v859, 96
      %v872 = vadd.s32 %v859, 104
      %v873 = vadd.s32 %v859, 112
      %v874 = vadd.s32 %v859, 120
      %v875 = vlaneseq
      %v876 = vand.u32 %v875, 127
      %vm877 = vcmp.ne.s32.totalorder %v859, %v876
      %vm878 = vcmp.ne.s32.totalorder %v860, %v876
      %vm879 = vcmp.ne.s32.totalorder %v861, %v876
      %vm880 = vcmp.ne.s32.totalorder %v862, %v876
      %vm881 = vcmp.ne.s32.totalorder %v863, %v876
      %vm882 = vcmp.ne.s32.totalorder %v864, %v876
      %vm883 = vcmp.ne.s32.totalorder %v865, %v876
      %vm884 = vcmp.ne.s32.totalorder %v866, %v876
      %vm885 = vcmp.ne.s32.totalorder %v867, %v876
      %vm886 = vcmp.ne.s32.totalorder %v868, %v876
      %vm887 = vcmp.ne.s32.totalorder %v869, %v876
      %vm888 = vcmp.ne.s32.totalorder %v870, %v876
      %vm889 = vcmp.ne.s32.totalorder %v871, %v876
      %vm890 = vcmp.ne.s32.totalorder %v872, %v876
      %vm891 = vcmp.ne.s32.totalorder %v873, %v876
      %vm892 = vcmp.ne.s32.totalorder %v874, %v876
      %v893 = vld [vmem:[#allocation2] sm:$0xff]
      %v894 = vld [vmem:[#allocation2 + $0x8] sm:$0xff]
      %v895 = vld [vmem:[#allocation2 + $0x10] sm:$0xff]
      %v896 = vld [vmem:[#allocation2 + $0x18] sm:$0xff]
      %v897 = vld [vmem:[#allocation2 + $0x20] sm:$0xff]
      %v898 = vld [vmem:[#allocation2 + $0x28] sm:$0xff]
      %v899 = vld [vmem:[#allocation2 + $0x30] sm:$0xff]
      %v900 = vld [vmem:[#allocation2 + $0x38] sm:$0xff]
      %v901 = vld [vmem:[#allocation2 + $0x40] sm:$0xff]
      %v902 = vld [vmem:[#allocation2 + $0x48] sm:$0xff]
      %v903 = vld [vmem:[#allocation2 + $0x50] sm:$0xff]
      %v904 = vld [vmem:[#allocation2 + $0x58] sm:$0xff]
      %v905 = vld [vmem:[#allocation2 + $0x60] sm:$0xff]
      %v906 = vld [vmem:[#allocation2 + $0x68] sm:$0xff]
      %v907 = vld [vmem:[#allocation2 + $0x70] sm:$0xff]
      %v908 = vld [vmem:[#allocation2 + $0x78] sm:$0xff]
      %v909 = vsel %vm877, %v579, 0.0
      %v910 = vsel %vm878, %v583, 0.0
      %v911 = vsel %vm879, %v587, 0.0
      %v912 = vsel %vm880, %v591, 0.0
      %v913 = vsel %vm881, %v595, 0.0
      %v914 = vsel %vm882, %v599, 0.0
      %v915 = vsel %vm883, %v603, 0.0
      %v916 = vsel %vm884, %v607, 0.0
      %v917 = vsel %vm885, %v611, 0.0
      %v918 = vsel %vm886, %v615, 0.0
      %v919 = vsel %vm887, %v619, 0.0
      %v920 = vsel %vm888, %v623, 0.0
      %v921 = vsel %vm889, %v627, 0.0
      %v922 = vsel %vm890, %v631, 0.0
      %v923 = vsel %vm891, %v635, 0.0
      %v924 = vsel %vm892, %v639, 0.0
      %v925 = vadd.f32 %v893, %v909
      %v926 = vadd.f32 %v894, %v910
      %v927 = vadd.f32 %v895, %v911
      %v928 = vadd.f32 %v896, %v912
      %v929 = vadd.f32 %v897, %v913
      %v930 = vadd.f32 %v898, %v914
      %v931 = vadd.f32 %v899, %v915
      %v932 = vadd.f32 %v900, %v916
      %v933 = vadd.f32 %v901, %v917
      %v934 = vadd.f32 %v902, %v918
      %v935 = vadd.f32 %v903, %v919
      %v936 = vadd.f32 %v904, %v920
      %v937 = vadd.f32 %v905, %v921
      %v938 = vadd.f32 %v906, %v922
      %v939 = vadd.f32 %v907, %v923
      %v940 = vadd.f32 %v908, %v924
      %941 = vst [vmem:[#allocation2] sm:$0xff] %v925
      %942 = vst [vmem:[#allocation2 + $0x8] sm:$0xff] %v926
      %943 = vst [vmem:[#allocation2 + $0x10] sm:$0xff] %v927
      %944 = vst [vmem:[#allocation2 + $0x18] sm:$0xff] %v928
      %945 = vst [vmem:[#allocation2 + $0x20] sm:$0xff] %v929
      %946 = vst [vmem:[#allocation2 + $0x28] sm:$0xff] %v930
      %947 = vst [vmem:[#allocation2 + $0x30] sm:$0xff] %v931
      %948 = vst [vmem:[#allocation2 + $0x38] sm:$0xff] %v932
      %949 = vst [vmem:[#allocation2 + $0x40] sm:$0xff] %v933
      %950 = vst [vmem:[#allocation2 + $0x48] sm:$0xff] %v934
      %951 = vst [vmem:[#allocation2 + $0x50] sm:$0xff] %v935
      %952 = vst [vmem:[#allocation2 + $0x58] sm:$0xff] %v936
      %953 = vst [vmem:[#allocation2 + $0x60] sm:$0xff] %v937
      %954 = vst [vmem:[#allocation2 + $0x68] sm:$0xff] %v938
      %955 = vst [vmem:[#allocation2 + $0x70] sm:$0xff] %v939
      %956 = vst [vmem:[#allocation2 + $0x78] sm:$0xff] %v940
      %v957 = vld [vmem:[#allocation3] sm:$0xff]
      %v958 = vld [vmem:[#allocation3 + $0x8] sm:$0xff]
      %v959 = vld [vmem:[#allocation3 + $0x10] sm:$0xff]
      %v960 = vld [vmem:[#allocation3 + $0x18] sm:$0xff]
      %v961 = vld [vmem:[#allocation3 + $0x20] sm:$0xff]
      %v962 = vld [vmem:[#allocation3 + $0x28] sm:$0xff]
      %v963 = vld [vmem:[#allocation3 + $0x30] sm:$0xff]
      %v964 = vld [vmem:[#allocation3 + $0x38] sm:$0xff]
      %v965 = vld [vmem:[#allocation3 + $0x40] sm:$0xff]
      %v966 = vld [vmem:[#allocation3 + $0x48] sm:$0xff]
      %v967 = vld [vmem:[#allocation3 + $0x50] sm:$0xff]
      %v968 = vld [vmem:[#allocation3 + $0x58] sm:$0xff]
      %v969 = vld [vmem:[#allocation3 + $0x60] sm:$0xff]
      %v970 = vld [vmem:[#allocation3 + $0x68] sm:$0xff]
      %v971 = vld [vmem:[#allocation3 + $0x70] sm:$0xff]
      %v972 = vld [vmem:[#allocation3 + $0x78] sm:$0xff]
      %v973 = vsel %vm877, %v659, 0.0
      %v974 = vsel %vm878, %v661, 0.0
      %v975 = vsel %vm879, %v663, 0.0
      %v976 = vsel %vm880, %v665, 0.0
      %v977 = vsel %vm881, %v667, 0.0
      %v978 = vsel %vm882, %v669, 0.0
      %v979 = vsel %vm883, %v671, 0.0
      %v980 = vsel %vm884, %v673, 0.0
      %v981 = vsel %vm885, %v675, 0.0
      %v982 = vsel %vm886, %v677, 0.0
      %v983 = vsel %vm887, %v679, 0.0
      %v984 = vsel %vm888, %v681, 0.0
      %v985 = vsel %vm889, %v683, 0.0
      %v986 = vsel %vm890, %v685, 0.0
      %v987 = vsel %vm891, %v687, 0.0
      %v988 = vsel %vm892, %v689, 0.0
      %v989 = vadd.f32 %v957, %v973
      %v990 = vadd.f32 %v958, %v974
      %v991 = vadd.f32 %v959, %v975
      %v992 = vadd.f32 %v960, %v976
      %v993 = vadd.f32 %v961, %v977
      %v994 = vadd.f32 %v962, %v978
      %v995 = vadd.f32 %v963, %v979
      %v996 = vadd.f32 %v964, %v980
      %v997 = vadd.f32 %v965, %v981
      %v998 = vadd.f32 %v966, %v982
      %v999 = vadd.f32 %v967, %v983
      %v1000 = vadd.f32 %v968, %v984
      %v1001 = vadd.f32 %v969, %v985
      %v1002 = vadd.f32 %v970, %v986
      %v1003 = vadd.f32 %v971, %v987
      %v1004 = vadd.f32 %v972, %v988
      %1005 = vst [vmem:[#allocation3] sm:$0xff] %v989
      %1006 = vst [vmem:[#allocation3 + $0x8] sm:$0xff] %v990
      %1007 = vst [vmem:[#allocation3 + $0x10] sm:$0xff] %v991
      %1008 = vst [vmem:[#allocation3 + $0x18] sm:$0xff] %v992
      %1009 = vst [vmem:[#allocation3 + $0x20] sm:$0xff] %v993
      %1010 = vst [vmem:[#allocation3 + $0x28] sm:$0xff] %v994
      %1011 = vst [vmem:[#allocation3 + $0x30] sm:$0xff] %v995
      %1012 = vst [vmem:[#allocation3 + $0x38] sm:$0xff] %v996
      %1013 = vst [vmem:[#allocation3 + $0x40] sm:$0xff] %v997
      %1014 = vst [vmem:[#allocation3 + $0x48] sm:$0xff] %v998
      %1015 = vst [vmem:[#allocation3 + $0x50] sm:$0xff] %v999
      %1016 = vst [vmem:[#allocation3 + $0x58] sm:$0xff] %v1000
      %1017 = vst [vmem:[#allocation3 + $0x60] sm:$0xff] %v1001
      %1018 = vst [vmem:[#allocation3 + $0x68] sm:$0xff] %v1002
      %1019 = vst [vmem:[#allocation3 + $0x70] sm:$0xff] %v1003
      %1020 = vst [vmem:[#allocation3 + $0x78] sm:$0xff] %v1004
    $region29: #{tpu_custom_call.1} parent=1 // pred_fallthru
      _
    // Predicated region
    $region30: #{tpu_custom_call.1} parent=1 // pred_check
      %p1021 = pneg %p44
    $region31: #{tpu_custom_call.1} parent=1 // pred_check_branch
      %1023 = sbr.rel (%p1021) target = $region33
    $region32: #{tpu_custom_call.1} parent=1 // pred_region
      %v1024 = vld [vmem:[#allocation2] sm:$0xff]
      %v1025 = vld [vmem:[#allocation2 + $0x8] sm:$0xff]
      %v1026 = vld [vmem:[#allocation2 + $0x10] sm:$0xff]
      %v1027 = vld [vmem:[#allocation2 + $0x18] sm:$0xff]
      %v1028 = vld [vmem:[#allocation2 + $0x20] sm:$0xff]
      %v1029 = vld [vmem:[#allocation2 + $0x28] sm:$0xff]
      %v1030 = vld [vmem:[#allocation2 + $0x30] sm:$0xff]
      %v1031 = vld [vmem:[#allocation2 + $0x38] sm:$0xff]
      %v1032 = vld [vmem:[#allocation2 + $0x40] sm:$0xff]
      %v1033 = vld [vmem:[#allocation2 + $0x48] sm:$0xff]
      %v1034 = vld [vmem:[#allocation2 + $0x50] sm:$0xff]
      %v1035 = vld [vmem:[#allocation2 + $0x58] sm:$0xff]
      %v1036 = vld [vmem:[#allocation2 + $0x60] sm:$0xff]
      %v1037 = vld [vmem:[#allocation2 + $0x68] sm:$0xff]
      %v1038 = vld [vmem:[#allocation2 + $0x70] sm:$0xff]
      %v1039 = vld [vmem:[#allocation2 + $0x78] sm:$0xff]
      %1040 = vadd.xlane.f32.xlu0 %v1024
      %v1041 = vpop.xlane.xlu0 %1040
      %1042 = vadd.xlane.f32.xlu0 %v1025
      %v1043 = vpop.xlane.xlu0 %1042
      %1044 = vadd.xlane.f32.xlu0 %v1026
      %v1045 = vpop.xlane.xlu0 %1044
      %1046 = vadd.xlane.f32.xlu0 %v1027
      %v1047 = vpop.xlane.xlu0 %1046
      %1048 = vadd.xlane.f32.xlu0 %v1028
      %v1049 = vpop.xlane.xlu0 %1048
      %1050 = vadd.xlane.f32.xlu0 %v1029
      %v1051 = vpop.xlane.xlu0 %1050
      %1052 = vadd.xlane.f32.xlu0 %v1030
      %v1053 = vpop.xlane.xlu0 %1052
      %1054 = vadd.xlane.f32.xlu0 %v1031
      %v1055 = vpop.xlane.xlu0 %1054
      %1056 = vadd.xlane.f32.xlu0 %v1032
      %v1057 = vpop.xlane.xlu0 %1056
      %1058 = vadd.xlane.f32.xlu0 %v1033
      %v1059 = vpop.xlane.xlu0 %1058
      %1060 = vadd.xlane.f32.xlu0 %v1034
      %v1061 = vpop.xlane.xlu0 %1060
      %1062 = vadd.xlane.f32.xlu0 %v1035
      %v1063 = vpop.xlane.xlu0 %1062
      %1064 = vadd.xlane.f32.xlu0 %v1036
      %v1065 = vpop.xlane.xlu0 %1064
      %1066 = vadd.xlane.f32.xlu0 %v1037
      %v1067 = vpop.xlane.xlu0 %1066
      %1068 = vadd.xlane.f32.xlu0 %v1038
      %v1069 = vpop.xlane.xlu0 %1068
      %1070 = vadd.xlane.f32.xlu0 %v1039
      %v1071 = vpop.xlane.xlu0 %1070
      %vm1072 = vcmask 7168
      %1073 = vst.msk [vmem:[%s2] sm:$0xff] %vm1072, %v1041
      %1074 = vst.msk [vmem:[%s2 + $0x8] sm:$0xff] %vm1072, %v1043
      %1075 = vst.msk [vmem:[%s2 + $0x10] sm:$0xff] %vm1072, %v1045
      %1076 = vst.msk [vmem:[%s2 + $0x18] sm:$0xff] %vm1072, %v1047
      %1077 = vst.msk [vmem:[%s2 + $0x20] sm:$0xff] %vm1072, %v1049
      %1078 = vst.msk [vmem:[%s2 + $0x28] sm:$0xff] %vm1072, %v1051
      %1079 = vst.msk [vmem:[%s2 + $0x30] sm:$0xff] %vm1072, %v1053
      %1080 = vst.msk [vmem:[%s2 + $0x38] sm:$0xff] %vm1072, %v1055
      %1081 = vst.msk [vmem:[%s2 + $0x40] sm:$0xff] %vm1072, %v1057
      %1082 = vst.msk [vmem:[%s2 + $0x48] sm:$0xff] %vm1072, %v1059
      %1083 = vst.msk [vmem:[%s2 + $0x50] sm:$0xff] %vm1072, %v1061
      %1084 = vst.msk [vmem:[%s2 + $0x58] sm:$0xff] %vm1072, %v1063
      %1085 = vst.msk [vmem:[%s2 + $0x60] sm:$0xff] %vm1072, %v1065
      %1086 = vst.msk [vmem:[%s2 + $0x68] sm:$0xff] %vm1072, %v1067
      %1087 = vst.msk [vmem:[%s2 + $0x70] sm:$0xff] %vm1072, %v1069
      %1088 = vst.msk [vmem:[%s2 + $0x78] sm:$0xff] %vm1072, %v1071
      %v1089 = vld [vmem:[#allocation3] sm:$0xff]
      %v1090 = vld [vmem:[#allocation3 + $0x8] sm:$0xff]
      %v1091 = vld [vmem:[#allocation3 + $0x10] sm:$0xff]
      %v1092 = vld [vmem:[#allocation3 + $0x18] sm:$0xff]
      %v1093 = vld [vmem:[#allocation3 + $0x20] sm:$0xff]
      %v1094 = vld [vmem:[#allocation3 + $0x28] sm:$0xff]
      %v1095 = vld [vmem:[#allocation3 + $0x30] sm:$0xff]
      %v1096 = vld [vmem:[#allocation3 + $0x38] sm:$0xff]
      %v1097 = vld [vmem:[#allocation3 + $0x40] sm:$0xff]
      %v1098 = vld [vmem:[#allocation3 + $0x48] sm:$0xff]
      %v1099 = vld [vmem:[#allocation3 + $0x50] sm:$0xff]
      %v1100 = vld [vmem:[#allocation3 + $0x58] sm:$0xff]
      %v1101 = vld [vmem:[#allocation3 + $0x60] sm:$0xff]
      %v1102 = vld [vmem:[#allocation3 + $0x68] sm:$0xff]
      %v1103 = vld [vmem:[#allocation3 + $0x70] sm:$0xff]
      %v1104 = vld [vmem:[#allocation3 + $0x78] sm:$0xff]
      %1105 = vadd.xlane.f32.xlu0 %v1089
      %v1106 = vpop.xlane.xlu0 %1105
      %1107 = vadd.xlane.f32.xlu0 %v1090
      %v1108 = vpop.xlane.xlu0 %1107
      %1109 = vadd.xlane.f32.xlu0 %v1091
      %v1110 = vpop.xlane.xlu0 %1109
      %1111 = vadd.xlane.f32.xlu0 %v1092
      %v1112 = vpop.xlane.xlu0 %1111
      %1113 = vadd.xlane.f32.xlu0 %v1093
      %v1114 = vpop.xlane.xlu0 %1113
      %1115 = vadd.xlane.f32.xlu0 %v1094
      %v1116 = vpop.xlane.xlu0 %1115
      %1117 = vadd.xlane.f32.xlu0 %v1095
      %v1118 = vpop.xlane.xlu0 %1117
      %1119 = vadd.xlane.f32.xlu0 %v1096
      %v1120 = vpop.xlane.xlu0 %1119
      %1121 = vadd.xlane.f32.xlu0 %v1097
      %v1122 = vpop.xlane.xlu0 %1121
      %1123 = vadd.xlane.f32.xlu0 %v1098
      %v1124 = vpop.xlane.xlu0 %1123
      %1125 = vadd.xlane.f32.xlu0 %v1099
      %v1126 = vpop.xlane.xlu0 %1125
      %1127 = vadd.xlane.f32.xlu0 %v1100
      %v1128 = vpop.xlane.xlu0 %1127
      %1129 = vadd.xlane.f32.xlu0 %v1101
      %v1130 = vpop.xlane.xlu0 %1129
      %1131 = vadd.xlane.f32.xlu0 %v1102
      %v1132 = vpop.xlane.xlu0 %1131
      %1133 = vadd.xlane.f32.xlu0 %v1103
      %v1134 = vpop.xlane.xlu0 %1133
      %1135 = vadd.xlane.f32.xlu0 %v1104
      %v1136 = vpop.xlane.xlu0 %1135
      %1137 = vst.msk [vmem:[%s3] sm:$0xff] %vm1072, %v1106
      %1138 = vst.msk [vmem:[%s3 + $0x8] sm:$0xff] %vm1072, %v1108
      %1139 = vst.msk [vmem:[%s3 + $0x10] sm:$0xff] %vm1072, %v1110
      %1140 = vst.msk [vmem:[%s3 + $0x18] sm:$0xff] %vm1072, %v1112
      %1141 = vst.msk [vmem:[%s3 + $0x20] sm:$0xff] %vm1072, %v1114
      %1142 = vst.msk [vmem:[%s3 + $0x28] sm:$0xff] %vm1072, %v1116
      %1143 = vst.msk [vmem:[%s3 + $0x30] sm:$0xff] %vm1072, %v1118
      %1144 = vst.msk [vmem:[%s3 + $0x38] sm:$0xff] %vm1072, %v1120
      %1145 = vst.msk [vmem:[%s3 + $0x40] sm:$0xff] %vm1072, %v1122
      %1146 = vst.msk [vmem:[%s3 + $0x48] sm:$0xff] %vm1072, %v1124
      %1147 = vst.msk [vmem:[%s3 + $0x50] sm:$0xff] %vm1072, %v1126
      %1148 = vst.msk [vmem:[%s3 + $0x58] sm:$0xff] %vm1072, %v1128
      %1149 = vst.msk [vmem:[%s3 + $0x60] sm:$0xff] %vm1072, %v1130
      %1150 = vst.msk [vmem:[%s3 + $0x68] sm:$0xff] %vm1072, %v1132
      %1151 = vst.msk [vmem:[%s3 + $0x70] sm:$0xff] %vm1072, %v1134
      %1152 = vst.msk [vmem:[%s3 + $0x78] sm:$0xff] %vm1072, %v1136
    $region33: #{tpu_custom_call.1} parent=1 // pred_fallthru
      _
    // Predicated region
    $region34: #{tpu_custom_call.1} parent=1 // pred_check
      _
    $region35: #{tpu_custom_call.1} parent=1 // pred_check_branch
      %1154 = sbr.rel (0) target = $region37
    $region36: #{tpu_custom_call.1} parent=1 // pred_region
      _
    $region37: #{tpu_custom_call.1} parent=1 // pred_fallthru
      _
    // Predicated region
    $region38: #{tpu_custom_call.1} parent=1 // pred_check
      _
    $region39: #{tpu_custom_call.1} parent=1 // pred_check_branch
      %1156 = sbr.rel (0) target = $region41
    $region40: #{tpu_custom_call.1} parent=1 // pred_region
      _
    $region41: #{tpu_custom_call.1} parent=1 // pred_fallthru
      _
    // Predicated region
    $region42: #{tpu_custom_call.1} parent=1 // pred_check
      _
    $region43: #{tpu_custom_call.1} parent=1 // pred_check_branch
      %1158 = sbr.rel (0) target = $region45
    $region44: #{tpu_custom_call.1} parent=1 // pred_region
      %s1160 = ssub.s32 128, 128
      %1161 = vsyncadd [#allocation6], %s1160
      %s1163 = sshll.u32 [#allocation9], 4
      %s1164 = int_to_ptr.vmem [resolvable:$true] %s1163
      %1166 = dma.vmem_to_hbm [thread:$0]  %s1164, 128, %s4, [#allocation6]
    $region45: #{tpu_custom_call.1} parent=1 // pred_fallthru
      _
    // Predicated region
    $region46: #{tpu_custom_call.1} parent=1 // pred_check
      _
    $region47: #{tpu_custom_call.1} parent=1 // pred_check_branch
      %1168 = sbr.rel (0) target = $region49
    $region48: #{tpu_custom_call.1} parent=1 // pred_region
      _
    $region49: #{tpu_custom_call.1} parent=1 // pred_fallthru
      _
    // Predicated region
    $region50: #{tpu_custom_call.1} parent=1 // pred_check
      _
    $region51: #{tpu_custom_call.1} parent=1 // pred_check_branch
      %1170 = sbr.rel (0) target = $region53
    $region52: #{tpu_custom_call.1} parent=1 // pred_region
      _
    $region53: #{tpu_custom_call.1} parent=1 // pred_fallthru
      _
    // Predicated region
    $region54: #{tpu_custom_call.1} parent=1 // pred_check
      _
    $region55: #{tpu_custom_call.1} parent=1 // pred_check_branch
      %1172 = sbr.rel (0) target = $region57
    $region56: #{tpu_custom_call.1} parent=1 // pred_region
      %1173 = dma.done [#allocation6], 128
    $region57: #{tpu_custom_call.1} parent=1 // pred_fallthru
      _
    %1174 = vsyncpa [#allocation5], 1
    %1175 = vsyncpa [#allocation8], 1
    %1176 = vsyncpa [#allocation6], 1

</llo_original>
